<compile_context>
chip_gen: v6e
topology: v6e:2x2x1
jax: 0.10.0
libtpu: 0.0.40
codegen_flags: <defaults>
</compile_context>

<pallas_src>
import math

import jax
import jax.numpy as jnp
from jax.experimental import pallas as pl
from jax.experimental.pallas import tpu as pltpu


def _parallel_params():
    # Batch-block grid axis is embarrassingly parallel -> let v7x split it over 2 TCs.
    return pltpu.CompilerParams(dimension_semantics=("parallel",))


# ----------------------------------------------------------------------------
# Kernel 1: fused LayerNorm + multi-head attention -> semantic adjacency
#   ln  = a*(x-mean)/(std+eps)+b            (torch-style: unbiased std, eps on std)
#   q,k = ln Wq + bq , ln Wk + bk           (per-head via static weight-ref slices)
#   adj_sem = mean_h softmax(q_h k_h^T/sqrt(dk), col-masked)
#   adj_sem: zero diag + identity, then row mask
# ----------------------------------------------------------------------------
def ln_attn_adj_pallas(x, ln_a, ln_b, wq, bq, wk, bk, src_mask, *, heads,
                       eps=1e-6, batch_block=None):
    B, N, D = x.shape
    dk = D // heads
    scale = 1.0 / math.sqrt(dk)
    bblk = B if batch_block is None else batch_block
    assert B % bblk == 0

    ln_a2 = ln_a.reshape(1, D).astype(jnp.float32)
    ln_b2 = ln_b.reshape(1, D).astype(jnp.float32)
    wq_bf = wq.astype(jnp.bfloat16)          # bf16 weights: half DMA bytes, full MXU rate
    wk_bf = wk.astype(jnp.bfloat16)
    bq2 = bq.reshape(1, D).astype(jnp.float32)
    bk2 = bk.reshape(1, D).astype(jnp.float32)
    mask_col = src_mask.reshape(B, 1, N).astype(jnp.float32)   # column mask for scores
    mask_row = src_mask.reshape(B, N, 1).astype(jnp.float32)   # row mask for adj_sem
    eye = jnp.eye(N, dtype=jnp.float32).reshape(1, N, N)       # precomputed once

    def kernel(x_ref, a_ref, b_ref, wq_ref, bq_ref, wk_ref, bk_ref,
               mc_ref, mr_ref, eye_ref, ln_ref, adj_ref):
        xv = x_ref[...]                                        # (bblk, N, D) f32
        mean = jnp.mean(xv, axis=-1, keepdims=True)
        var = jnp.sum((xv - mean) ** 2, axis=-1, keepdims=True) / (D - 1)
        inv_std = pl.reciprocal(jnp.sqrt(var) + eps, approx=True)   # EUP slot
        ln = a_ref[...] * (xv - mean) * inv_std + b_ref[...]
        ln_ref[...] = ln                                       # gcn_inputs output

        # One flattened (bblk*N, D) activation slab feeds all head projections.
        x2 = ln.reshape(bblk * N, D).astype(jnp.bfloat16)
        mc = mc_ref[...]                                       # (bblk, 1, N)

        adj_ref[...] = jnp.zeros_like(adj_ref)                 # accumulate heads in-ref
        for h in range(heads):                                 # static unroll, heads is small
            lo = h * dk
            qh = (jnp.dot(x2, wq_ref[:, lo:lo + dk],
                          preferred_element_type=jnp.float32) + bq_ref[:, lo:lo + dk])
            kh = (jnp.dot(x2, wk_ref[:, lo:lo + dk],
                          preferred_element_type=jnp.float32) + bk_ref[:, lo:lo + dk])
            qh = qh.reshape(bblk, N, dk).astype(jnp.bfloat16)
            kh = kh.reshape(bblk, N, dk).astype(jnp.bfloat16)
            s = jnp.einsum('bqd,bkd->bqk', qh, kh,
                           preferred_element_type=jnp.float32) * scale
            s = jnp.where(mc == 0.0, -1000000000.0, s)         # masked_fill
            adj_ref[...] += jax.nn.softmax(s, axis=-1)

        a_sem = adj_ref[...] * (1.0 / heads)
        ey = eye_ref[...]                                      # (1, N, N)
        a_sem = a_sem - a_sem * ey + ey                        # diag -> 1
        adj_ref[...] = mr_ref[...] * a_sem                     # row mask

    grid = (B // bblk,)
    ln_out, adj_sem = pl.pallas_call(
        kernel,
        out_shape=(jax.ShapeDtypeStruct((B, N, D), jnp.float32),
                   jax.ShapeDtypeStruct((B, N, N), jnp.float32)),
        grid=grid,
        in_specs=[
            pl.BlockSpec((bblk, N, D), lambda i: (i, 0, 0)),
            pl.BlockSpec((1, D), lambda i: (0, 0)),
            pl.BlockSpec((1, D), lambda i: (0, 0)),
            pl.BlockSpec((D, D), lambda i: (0, 0)),
            pl.BlockSpec((1, D), lambda i: (0, 0)),
            pl.BlockSpec((D, D), lambda i: (0, 0)),
            pl.BlockSpec((1, D), lambda i: (0, 0)),
            pl.BlockSpec((bblk, 1, N), lambda i: (i, 0, 0)),
            pl.BlockSpec((bblk, N, 1), lambda i: (i, 0, 0)),
            pl.BlockSpec((1, N, N), lambda i: (0, 0, 0)),
        ],
        out_specs=[
            pl.BlockSpec((bblk, N, D), lambda i: (i, 0, 0)),
            pl.BlockSpec((bblk, N, N), lambda i: (i, 0, 0)),
        ],
        compiler_params=_parallel_params(),
    )(x, ln_a2, ln_b2, wq_bf, bq2, wk_bf, bk2, mask_col, mask_row, eye)
    return ln_out, adj_sem


# ----------------------------------------------------------------------------
# Kernel 2: fused dual GCN layer (syntactic + semantic branch in one kernel)
#   for each branch:  H = LeakyReLU( ((adj @ x) W + b) * 1/(adj.sum(-1)+1), gamma )
#   Row sums computed in-kernel (no (B,N,1) HBM tensors); divide via approx reciprocal.
# ----------------------------------------------------------------------------
def dual_gcn_layer_pallas(adj_syn, adj_sem, x_syn, x_sem, w_syn, b_syn,
                          w_sem, b_sem, *, gamma, batch_block=None):
    B, N, Din = x_syn.shape
    Dout = w_syn.shape[1]
    bblk = B if batch_block is None else batch_block
    assert B % bblk == 0

    w_syn_bf = w_syn.astype(jnp.bfloat16)
    w_sem_bf = w_sem.astype(jnp.bfloat16)
    b_syn2 = b_syn.reshape(1, Dout).astype(jnp.float32)
    b_sem2 = b_sem.reshape(1, Dout).astype(jnp.float32)

    def kernel(as_ref, am_ref, xs_ref, xm_ref, ws_ref, bs_ref, wm_ref, bm_ref,
               os_ref, om_ref):
        a_syn = as_ref[...]                                    # (bblk, N, N) f32
        a_sem = am_ref[...]
        inv_den_syn = pl.reciprocal(
            jnp.sum(a_syn, axis=-1, keepdims=True) + 1.0, approx=True)
        inv_den_sem = pl.reciprocal(
            jnp.sum(a_sem, axis=-1, keepdims=True) + 1.0, approx=True)

        xs = xs_ref[...].astype(jnp.bfloat16)
        xm = xm_ref[...].astype(jnp.bfloat16)
        ax_syn = jnp.einsum('bij,bjd->bid', a_syn.astype(jnp.bfloat16), xs,
                            preferred_element_type=jnp.float32)
        ax_sem = jnp.einsum('bij,bjd->bid', a_sem.astype(jnp.bfloat16), xm,
                            preferred_element_type=jnp.float32)

        # Flattened (bblk*N, Din) @ (Din, Dout) — one wide matmul per branch.
        axw_syn = (jnp.dot(ax_syn.reshape(bblk * N, Din).astype(jnp.bfloat16),
                           ws_ref[...], preferred_element_type=jnp.float32)
                   + bs_ref[...]).reshape(bblk, N, Dout) * inv_den_syn
        axw_sem = (jnp.dot(ax_sem.reshape(bblk * N, Din).astype(jnp.bfloat16),
                           wm_ref[...], preferred_element_type=jnp.float32)
                   + bm_ref[...]).reshape(bblk, N, Dout) * inv_den_sem

        os_ref[...] = jnp.where(axw_syn >= 0.0, axw_syn, gamma * axw_syn)   # LeakyReLU
        om_ref[...] = jnp.where(axw_sem >= 0.0, axw_sem, gamma * axw_sem)

    grid = (B // bblk,)
    return pl.pallas_call(
        kernel,
        out_shape=(jax.ShapeDtypeStruct((B, N, Dout), jnp.float32),
                   jax.ShapeDtypeStruct((B, N, Dout), jnp.float32)),
        grid=grid,
        in_specs=[
            pl.BlockSpec((bblk, N, N), lambda i: (i, 0, 0)),
            pl.BlockSpec((bblk, N, N), lambda i: (i, 0, 0)),
            pl.BlockSpec((bblk, N, Din), lambda i: (i, 0, 0)),
            pl.BlockSpec((bblk, N, Din), lambda i: (i, 0, 0)),
            pl.BlockSpec((Din, Dout), lambda i: (0, 0)),
            pl.BlockSpec((1, Dout), lambda i: (0, 0)),
            pl.BlockSpec((Din, Dout), lambda i: (0, 0)),
            pl.BlockSpec((1, Dout), lambda i: (0, 0)),
        ],
        out_specs=[
            pl.BlockSpec((bblk, N, Dout), lambda i: (i, 0, 0)),
            pl.BlockSpec((bblk, N, Dout), lambda i: (i, 0, 0)),
        ],
        compiler_params=_parallel_params(),
    )(adj_syn, adj_sem, x_syn, x_sem, w_syn_bf, b_syn2, w_sem_bf, b_sem2)


# ----------------------------------------------------------------------------
# GCNBert forward (Pallas kernels for the hot path, plain JAX glue elsewhere)
# ----------------------------------------------------------------------------
def gcn_bert_forward(params, adj, inputs, *, num_layers, heads, gamma):
    (text_bert_indices, bert_segments_ids, attention_mask,
     asp_start, asp_end, adj_dep, src_mask, aspect_mask) = inputs
    del bert_segments_ids, attention_mask, asp_start, asp_end, adj_dep, aspect_mask

    # --- BERT stub (deterministic embedding + tanh pooler), plain JAX glue ---
    # TODO(synk): real BERT encoder not implemented; deterministic stub instead.
    sequence_output = params["bert_emb"][text_bert_indices]            # (B, N, D)
    pooled_output = jnp.tanh(sequence_output[:, 0, :] @ params["pool_w"]
                             + params["pool_b"])                       # (B, D)
    # bert_drop / pooled_drop / gcn_drop: identity (eval mode)

    # Fused LayerNorm + multi-head-attention adjacency (single Pallas kernel)
    gcn_inputs, adj_sem = ln_attn_adj_pallas(
        sequence_output, params["ln_a"], params["ln_b"],
        params["attn_wq"], params["attn_bq"],
        params["attn_wk"], params["attn_bk"],
        src_mask, heads=heads)

    # Fused syn+sem GCN layers (one Pallas kernel per layer; denoms in-kernel)
    outputs_syn = gcn_inputs
    outputs_sem = gcn_inputs
    H_syn = None
    H_sem = None
    for l in range(num_layers):
        H_syn, H_sem = dual_gcn_layer_pallas(
            adj, adj_sem, outputs_syn, outputs_sem,
            params["W_w"][l], params["W_b"][l],
            params["WL_w"][l], params["WL_b"][l],
            gamma=gamma)
        outputs_syn = H_syn
        outputs_sem = H_sem

    return H_syn, H_sem, adj_sem, pooled_output


# ----------------------------------------------------------------------------
# Deterministic parameter / input construction and smoke test
# ----------------------------------------------------------------------------
if __name__ == "__main__":
    key = jax.random.PRNGKey(0)

    # small config consistent with the module
    B, N = 2, 8
    bert_dim = 32
    heads = 4
    num_layers = 2
    mem_dim = bert_dim // 2
    gamma = 0.2
    vocab = 30

    ks = jax.random.split(key, 16)

    def init_linear(kw, kb, din, dout, scale=0.1):
        # stored directly as (din, dout) so kernels do x @ W + b
        w = scale * jax.random.normal(kw, (din, dout), jnp.float32)
        b = scale * jax.random.normal(kb, (dout,), jnp.float32)
        return w, b

    params = {
        "bert_emb": 0.5 * jax.random.normal(ks[0], (vocab, bert_dim), jnp.float32),
        "pool_w": 0.1 * jax.random.normal(ks[1], (bert_dim, bert_dim), jnp.float32),
        "pool_b": jnp.zeros((bert_dim,), jnp.float32),
        "ln_a": jnp.ones((bert_dim,), jnp.float32),
        "ln_b": jnp.zeros((bert_dim,), jnp.float32),
    }
    params["attn_wq"], params["attn_bq"] = init_linear(ks[2], ks[3], bert_dim, bert_dim)
    params["attn_wk"], params["attn_bk"] = init_linear(ks[4], ks[5], bert_dim, bert_dim)

    W_w, W_b, WL_w, WL_b = [], [], [], []
    for l in range(num_layers):
        din = bert_dim if l == 0 else mem_dim
        w, b = init_linear(ks[6 + l], ks[8 + l], din, mem_dim)
        W_w.append(w); W_b.append(b)
        w2, b2 = init_linear(ks[10 + l], ks[12 + l], din, mem_dim)
        WL_w.append(w2); WL_b.append(b2)
    params["W_w"], params["W_b"] = W_w, W_b
    params["WL_w"], params["WL_b"] = WL_w, WL_b

    # inputs
    text_bert_indices = jax.random.randint(ks[14], (B, N), 0, vocab)
    bert_segments_ids = jnp.zeros((B, N), jnp.int32)
    attention_mask = jnp.ones((B, N), jnp.int32)
    asp_start = jnp.array([1, 2], jnp.int32)
    asp_end = jnp.array([2, 3], jnp.int32)
    adj_dep = jnp.zeros((B, N, N), jnp.float32)
    src_mask = jnp.ones((B, N), jnp.float32).at[1, N - 2:].set(0.0)
    aspect_mask = jnp.zeros((B, N), jnp.float32)

    adj_raw = (jax.random.uniform(ks[15], (B, N, N)) > 0.5).astype(jnp.float32)
    adj = jnp.maximum(adj_raw, jnp.transpose(adj_raw, (0, 2, 1)))       # (B, N, N)

    inputs = (text_bert_indices, bert_segments_ids, attention_mask,
              asp_start, asp_end, adj_dep, src_mask, aspect_mask)

    H_syn, H_sem, adj_sem, pooled = gcn_bert_forward(
        params, adj, inputs, num_layers=num_layers, heads=heads, gamma=gamma)

    jax.block_until_ready((H_syn, H_sem, adj_sem, pooled))

    assert H_syn.shape == (B, N, mem_dim)
    assert H_sem.shape == (B, N, mem_dim)
    assert adj_sem.shape == (B, N, N)
    assert pooled.shape == (B, bert_dim)
    print("KERNEL_OK")
</pallas_src>

<mosaic_0001>
module attributes {stable_mosaic.version = 11 : i64} {
  func.func @kernel(%arg0: i32, %arg1: memref<2x8x32xf32, #tpu.memory_space<vmem>>, %arg2: memref<1x32xf32, #tpu.memory_space<vmem>>, %arg3: memref<1x32xf32, #tpu.memory_space<vmem>>, %arg4: memref<32x32xbf16, #tpu.memory_space<vmem>>, %arg5: memref<1x32xf32, #tpu.memory_space<vmem>>, %arg6: memref<32x32xbf16, #tpu.memory_space<vmem>>, %arg7: memref<1x32xf32, #tpu.memory_space<vmem>>, %arg8: memref<2x1x8xf32, #tpu.memory_space<vmem>>, %arg9: memref<2x8x1xf32, #tpu.memory_space<vmem>>, %arg10: memref<1x8x8xf32, #tpu.memory_space<vmem>>, %arg11: memref<2x8x32xf32, #tpu.memory_space<vmem>>, %arg12: memref<2x8x8xf32, #tpu.memory_space<vmem>>) attributes {dimension_semantics = [#tpu.dimension_semantics<parallel>], iteration_bounds = array<i64: 1>, scalar_prefetch = 0 : i64, scratch_operands = 0 : i64, tpu.core_type = #tpu.core_type<tc>, window_params = [{transform_indices = @transform_0, window_bounds = array<i64: 2, 8, 32>}, {pipeline_mode = #tpu.pipeline_mode<synchronous>, transform_indices = @transform_1, window_bounds = array<i64: 1, 32>}, {pipeline_mode = #tpu.pipeline_mode<synchronous>, transform_indices = @transform_2, window_bounds = array<i64: 1, 32>}, {pipeline_mode = #tpu.pipeline_mode<synchronous>, transform_indices = @transform_3, window_bounds = array<i64: 32, 32>}, {pipeline_mode = #tpu.pipeline_mode<synchronous>, transform_indices = @transform_4, window_bounds = array<i64: 1, 32>}, {pipeline_mode = #tpu.pipeline_mode<synchronous>, transform_indices = @transform_5, window_bounds = array<i64: 32, 32>}, {pipeline_mode = #tpu.pipeline_mode<synchronous>, transform_indices = @transform_6, window_bounds = array<i64: 1, 32>}, {transform_indices = @transform_7, window_bounds = array<i64: 2, 1, 8>}, {transform_indices = @transform_8, window_bounds = array<i64: 2, 8, 1>}, {pipeline_mode = #tpu.pipeline_mode<synchronous>, transform_indices = @transform_9, window_bounds = array<i64: 1, 8, 8>}, {transform_indices = @transform_10, window_bounds = array<i64: 2, 8, 32>}, {transform_indices = @transform_11, window_bounds = array<i64: 2, 8, 8>}]} {
    %c0 = arith.constant 0 : index
    %c0_0 = arith.constant 0 : index
    %c0_1 = arith.constant 0 : index
    %0 = vector.load %arg1[%c0, %c0_0, %c0_1] : memref<2x8x32xf32, #tpu.memory_space<vmem>>, vector<2x8x32xf32>
    %cst = arith.constant dense<0.000000e+00> : vector<2x8xf32>
    %1 = vector.multi_reduction <add>, %0, %cst [2] : vector<2x8x32xf32> to vector<2x8xf32>
    %2 = vector.shape_cast %1 : vector<2x8xf32> to vector<2x8x1xf32>
    %cst_2 = arith.constant 3.200000e+01 : f32
    %3 = vector.broadcast %cst_2 : f32 to vector<2x8x1xf32>
    %4 = arith.divf %2, %3 : vector<2x8x1xf32>
    %5 = vector.broadcast %4 : vector<2x8x1xf32> to vector<2x8x32xf32>
    %6 = arith.subf %0, %5 : vector<2x8x32xf32>
    %7 = arith.mulf %6, %6 : vector<2x8x32xf32>
    %cst_3 = arith.constant dense<0.000000e+00> : vector<2x8xf32>
    %8 = vector.multi_reduction <add>, %7, %cst_3 [2] : vector<2x8x32xf32> to vector<2x8xf32>
    %9 = vector.shape_cast %8 : vector<2x8xf32> to vector<2x8x1xf32>
    %cst_4 = arith.constant 3.100000e+01 : f32
    %10 = vector.broadcast %cst_4 : f32 to vector<2x8x1xf32>
    %11 = arith.divf %9, %10 : vector<2x8x1xf32>
    %12 = math.sqrt %11 : vector<2x8x1xf32>
    %cst_5 = arith.constant 9.99999997E-7 : f32
    %13 = vector.broadcast %cst_5 : f32 to vector<2x8x1xf32>
    %14 = arith.addf %12, %13 : vector<2x8x1xf32>
    %15 = tpu.reciprocal %14 {approx = true} : vector<2x8x1xf32> -> vector<2x8x1xf32>
    %c0_6 = arith.constant 0 : index
    %c0_7 = arith.constant 0 : index
    %16 = vector.load %arg2[%c0_6, %c0_7] : memref<1x32xf32, #tpu.memory_space<vmem>>, vector<1x32xf32>
    %17 = vector.broadcast %4 : vector<2x8x1xf32> to vector<2x8x32xf32>
    %18 = arith.subf %0, %17 : vector<2x8x32xf32>
    %19 = vector.shape_cast %16 : vector<1x32xf32> to vector<1x1x32xf32>
    %20 = vector.broadcast %19 : vector<1x1x32xf32> to vector<2x8x32xf32>
    %21 = arith.mulf %20, %18 : vector<2x8x32xf32>
    %22 = vector.broadcast %15 : vector<2x8x1xf32> to vector<2x8x32xf32>
    %23 = arith.mulf %21, %22 : vector<2x8x32xf32>
    %c0_8 = arith.constant 0 : index
    %c0_9 = arith.constant 0 : index
    %24 = vector.load %arg3[%c0_8, %c0_9] : memref<1x32xf32, #tpu.memory_space<vmem>>, vector<1x32xf32>
    %25 = vector.shape_cast %24 : vector<1x32xf32> to vector<1x1x32xf32>
    %26 = vector.broadcast %25 : vector<1x1x32xf32> to vector<2x8x32xf32>
    %27 = arith.addf %23, %26 : vector<2x8x32xf32>
    %c0_10 = arith.constant 0 : index
    %c0_11 = arith.constant 0 : index
    %c0_12 = arith.constant 0 : index
    %28 = vector.load %arg11[%c0_10, %c0_11, %c0_12] : memref<2x8x32xf32, #tpu.memory_space<vmem>>, vector<2x8x32xf32>
    tpu.vector_store %arg11[%c0_10, %c0_11, %c0_12], %27 {strides = array<i32>} : memref<2x8x32xf32, #tpu.memory_space<vmem>>, vector<2x8x32xf32>,
    %29 = vector.shape_cast %27 : vector<2x8x32xf32> to vector<16x32xf32>
    %30 = arith.truncf %29 : vector<16x32xf32> to vector<16x32xbf16>
    %c0_13 = arith.constant 0 : index
    %c0_14 = arith.constant 0 : index
    %c0_15 = arith.constant 0 : index
    %31 = vector.load %arg8[%c0_13, %c0_14, %c0_15] : memref<2x1x8xf32, #tpu.memory_space<vmem>>, vector<2x1x8xf32>
    %cst_16 = arith.constant 0.000000e+00 : f32
    %32 = vector.broadcast %cst_16 : f32 to vector<2x8x8xf32>
    %c0_17 = arith.constant 0 : index
    %c0_18 = arith.constant 0 : index
    %c0_19 = arith.constant 0 : index
    %33 = vector.load %arg12[%c0_17, %c0_18, %c0_19] : memref<2x8x8xf32, #tpu.memory_space<vmem>>, vector<2x8x8xf32>
    tpu.vector_store %arg12[%c0_17, %c0_18, %c0_19], %32 {strides = array<i32>} : memref<2x8x8xf32, #tpu.memory_space<vmem>>, vector<2x8x8xf32>,
    %c0_20 = arith.constant 0 : index
    %c0_21 = arith.constant 0 : index
    %34 = vector.load %arg4[%c0_20, %c0_21] : memref<32x32xbf16, #tpu.memory_space<vmem>>, vector<32x8xbf16>
    %cst_22 = arith.constant dense<0.000000e+00> : vector<16x8xf32>
    %35 = tpu.matmul %30, %34, %cst_22 {dimension_numbers = #tpu.dot_dimension_numbers<[1], [0], [0], [1], [0, 0, 1, 1], [], []>} : vector<16x32xbf16>, vector<32x8xbf16>, vector<16x8xf32> -> vector<16x8xf32>
    %c0_23 = arith.constant 0 : index
    %c0_24 = arith.constant 0 : index
    %36 = vector.load %arg5[%c0_23, %c0_24] : memref<1x32xf32, #tpu.memory_space<vmem>>, vector<1x8xf32>
    %37 = vector.broadcast %36 : vector<1x8xf32> to vector<16x8xf32>
    %38 = arith.addf %35, %37 : vector<16x8xf32>
    %c0_25 = arith.constant 0 : index
    %c0_26 = arith.constant 0 : index
    %39 = vector.load %arg6[%c0_25, %c0_26] : memref<32x32xbf16, #tpu.memory_space<vmem>>, vector<32x8xbf16>
    %cst_27 = arith.constant dense<0.000000e+00> : vector<16x8xf32>
    %40 = tpu.matmul %30, %39, %cst_27 {dimension_numbers = #tpu.dot_dimension_numbers<[1], [0], [0], [1], [0, 0, 1, 1], [], []>} : vector<16x32xbf16>, vector<32x8xbf16>, vector<16x8xf32> -> vector<16x8xf32>
    %c0_28 = arith.constant 0 : index
    %c0_29 = arith.constant 0 : index
    %41 = vector.load %arg7[%c0_28, %c0_29] : memref<1x32xf32, #tpu.memory_space<vmem>>, vector<1x8xf32>
    %42 = vector.broadcast %41 : vector<1x8xf32> to vector<16x8xf32>
    %43 = arith.addf %40, %42 : vector<16x8xf32>
    %44 = vector.shape_cast %38 : vector<16x8xf32> to vector<2x8x8xf32>
    %45 = arith.truncf %44 : vector<2x8x8xf32> to vector<2x8x8xbf16>
    %46 = vector.shape_cast %43 : vector<16x8xf32> to vector<2x8x8xf32>
    %47 = arith.truncf %46 : vector<2x8x8xf32> to vector<2x8x8xbf16>
    "tpu.trace_start"() <{level = 10 : i32, message = "bqd,bkd->bqk"}> : () -> ()
    %cst_30 = arith.constant dense<0.000000e+00> : vector<2x8x8xf32>
    %48 = tpu.matmul %45, %47, %cst_30 {dimension_numbers = #tpu.dot_dimension_numbers<[2], [2], [1], [1], [0, 0, 0, 1, 1, 1], [0], [0]>} : vector<2x8x8xbf16>, vector<2x8x8xbf16>, vector<2x8x8xf32> -> vector<2x8x8xf32>
    "tpu.trace_stop"() : () -> ()
    %cst_31 = arith.constant 0.353553385 : f32
    %49 = vector.broadcast %cst_31 : f32 to vector<2x8x8xf32>
    %50 = arith.mulf %48, %49 : vector<2x8x8xf32>
    %cst_32 = arith.constant 0.000000e+00 : f32
    %51 = vector.broadcast %cst_32 : f32 to vector<2x1x8xf32>
    %52 = arith.cmpf oeq, %31, %51 : vector<2x1x8xf32>
    %cst_33 = arith.constant -1.000000e+09 : f32
    %53 = vector.shape_cast %52 : vector<2x1x8xi1> to vector<2x1x8xi1>
    %54 = vector.broadcast %53 : vector<2x1x8xi1> to vector<2x8x8xi1>
    %55 = vector.broadcast %cst_33 : f32 to vector<2x8x8xf32>
    %56 = arith.select %54, %55, %50 : vector<2x8x8xi1>, vector<2x8x8xf32>
    %c0_34 = arith.constant 0 : index
    %c0_35 = arith.constant 0 : index
    %c0_36 = arith.constant 0 : index
    %57 = vector.load %arg12[%c0_34, %c0_35, %c0_36] : memref<2x8x8xf32, #tpu.memory_space<vmem>>, vector<2x8x8xf32>
    %cst_37 = arith.constant dense<0xFF800000> : vector<2x8xf32>
    %58 = vector.multi_reduction <maximumf>, %56, %cst_37 [2] : vector<2x8x8xf32> to vector<2x8xf32>
    %cst_38 = arith.constant 0xFF800000 : f32
    %59 = vector.broadcast %cst_38 : f32 to vector<2x8xf32>
    %60 = arith.maximumf %59, %58 : vector<2x8xf32>
    %61 = vector.shape_cast %60 : vector<2x8xf32> to vector<2x8x1xf32>
    %62 = vector.broadcast %61 : vector<2x8x1xf32> to vector<2x8x8xf32>
    %63 = arith.subf %56, %62 : vector<2x8x8xf32>
    %64 = math.exp %63 : vector<2x8x8xf32>
    %cst_39 = arith.constant dense<0.000000e+00> : vector<2x8xf32>
    %65 = vector.multi_reduction <add>, %64, %cst_39 [2] : vector<2x8x8xf32> to vector<2x8xf32>
    %66 = vector.shape_cast %65 : vector<2x8xf32> to vector<2x8x1xf32>
    %67 = vector.broadcast %66 : vector<2x8x1xf32> to vector<2x8x8xf32>
    %68 = arith.divf %64, %67 : vector<2x8x8xf32>
    %69 = arith.addf %57, %68 : vector<2x8x8xf32>
    %c0_40 = arith.constant 0 : index
    %c0_41 = arith.constant 0 : index
    %c0_42 = arith.constant 0 : index
    %70 = vector.load %arg12[%c0_40, %c0_41, %c0_42] : memref<2x8x8xf32, #tpu.memory_space<vmem>>, vector<2x8x8xf32>
    tpu.vector_store %arg12[%c0_40, %c0_41, %c0_42], %69 {strides = array<i32>} : memref<2x8x8xf32, #tpu.memory_space<vmem>>, vector<2x8x8xf32>,
    %c0_43 = arith.constant 0 : index
    %c8 = arith.constant 8 : index
    %71 = vector.load %arg4[%c0_43, %c8] : memref<32x32xbf16, #tpu.memory_space<vmem>>, vector<32x8xbf16>
    %cst_44 = arith.constant dense<0.000000e+00> : vector<16x8xf32>
    %72 = tpu.matmul %30, %71, %cst_44 {dimension_numbers = #tpu.dot_dimension_numbers<[1], [0], [0], [1], [0, 0, 1, 1], [], []>} : vector<16x32xbf16>, vector<32x8xbf16>, vector<16x8xf32> -> vector<16x8xf32>
    %c0_45 = arith.constant 0 : index
    %c8_46 = arith.constant 8 : index
    %73 = vector.load %arg5[%c0_45, %c8_46] : memref<1x32xf32, #tpu.memory_space<vmem>>, vector<1x8xf32>
    %74 = vector.broadcast %73 : vector<1x8xf32> to vector<16x8xf32>
    %75 = arith.addf %72, %74 : vector<16x8xf32>
    %c0_47 = arith.constant 0 : index
    %c8_48 = arith.constant 8 : index
    %76 = vector.load %arg6[%c0_47, %c8_48] : memref<32x32xbf16, #tpu.memory_space<vmem>>, vector<32x8xbf16>
    %cst_49 = arith.constant dense<0.000000e+00> : vector<16x8xf32>
    %77 = tpu.matmul %30, %76, %cst_49 {dimension_numbers = #tpu.dot_dimension_numbers<[1], [0], [0], [1], [0, 0, 1, 1], [], []>} : vector<16x32xbf16>, vector<32x8xbf16>, vector<16x8xf32> -> vector<16x8xf32>
    %c0_50 = arith.constant 0 : index
    %c8_51 = arith.constant 8 : index
    %78 = vector.load %arg7[%c0_50, %c8_51] : memref<1x32xf32, #tpu.memory_space<vmem>>, vector<1x8xf32>
    %79 = vector.broadcast %78 : vector<1x8xf32> to vector<16x8xf32>
    %80 = arith.addf %77, %79 : vector<16x8xf32>
    %81 = vector.shape_cast %75 : vector<16x8xf32> to vector<2x8x8xf32>
    %82 = arith.truncf %81 : vector<2x8x8xf32> to vector<2x8x8xbf16>
    %83 = vector.shape_cast %80 : vector<16x8xf32> to vector<2x8x8xf32>
    %84 = arith.truncf %83 : vector<2x8x8xf32> to vector<2x8x8xbf16>
    "tpu.trace_start"() <{level = 10 : i32, message = "bqd,bkd->bqk"}> : () -> ()
    %cst_52 = arith.constant dense<0.000000e+00> : vector<2x8x8xf32>
    %85 = tpu.matmul %82, %84, %cst_52 {dimension_numbers = #tpu.dot_dimension_numbers<[2], [2], [1], [1], [0, 0, 0, 1, 1, 1], [0], [0]>} : vector<2x8x8xbf16>, vector<2x8x8xbf16>, vector<2x8x8xf32> -> vector<2x8x8xf32>
    "tpu.trace_stop"() : () -> ()
    %cst_53 = arith.constant 0.353553385 : f32
    %86 = vector.broadcast %cst_53 : f32 to vector<2x8x8xf32>
    %87 = arith.mulf %85, %86 : vector<2x8x8xf32>
    %cst_54 = arith.constant 0.000000e+00 : f32
    %88 = vector.broadcast %cst_54 : f32 to vector<2x1x8xf32>
    %89 = arith.cmpf oeq, %31, %88 : vector<2x1x8xf32>
    %cst_55 = arith.constant -1.000000e+09 : f32
    %90 = vector.shape_cast %89 : vector<2x1x8xi1> to vector<2x1x8xi1>
    %91 = vector.broadcast %90 : vector<2x1x8xi1> to vector<2x8x8xi1>
    %92 = vector.broadcast %cst_55 : f32 to vector<2x8x8xf32>
    %93 = arith.select %91, %92, %87 : vector<2x8x8xi1>, vector<2x8x8xf32>
    %c0_56 = arith.constant 0 : index
    %c0_57 = arith.constant 0 : index
    %c0_58 = arith.constant 0 : index
    %94 = vector.load %arg12[%c0_56, %c0_57, %c0_58] : memref<2x8x8xf32, #tpu.memory_space<vmem>>, vector<2x8x8xf32>
    %cst_59 = arith.constant dense<0xFF800000> : vector<2x8xf32>
    %95 = vector.multi_reduction <maximumf>, %93, %cst_59 [2] : vector<2x8x8xf32> to vector<2x8xf32>
    %cst_60 = arith.constant 0xFF800000 : f32
    %96 = vector.broadcast %cst_60 : f32 to vector<2x8xf32>
    %97 = arith.maximumf %96, %95 : vector<2x8xf32>
    %98 = vector.shape_cast %97 : vector<2x8xf32> to vector<2x8x1xf32>
    %99 = vector.broadcast %98 : vector<2x8x1xf32> to vector<2x8x8xf32>
    %100 = arith.subf %93, %99 : vector<2x8x8xf32>
    %101 = math.exp %100 : vector<2x8x8xf32>
    %cst_61 = arith.constant dense<0.000000e+00> : vector<2x8xf32>
    %102 = vector.multi_reduction <add>, %101, %cst_61 [2] : vector<2x8x8xf32> to vector<2x8xf32>
    %103 = vector.shape_cast %102 : vector<2x8xf32> to vector<2x8x1xf32>
    %104 = vector.broadcast %103 : vector<2x8x1xf32> to vector<2x8x8xf32>
    %105 = arith.divf %101, %104 : vector<2x8x8xf32>
    %106 = arith.addf %94, %105 : vector<2x8x8xf32>
    %c0_62 = arith.constant 0 : index
    %c0_63 = arith.constant 0 : index
    %c0_64 = arith.constant 0 : index
    %107 = vector.load %arg12[%c0_62, %c0_63, %c0_64] : memref<2x8x8xf32, #tpu.memory_space<vmem>>, vector<2x8x8xf32>
    tpu.vector_store %arg12[%c0_62, %c0_63, %c0_64], %106 {strides = array<i32>} : memref<2x8x8xf32, #tpu.memory_space<vmem>>, vector<2x8x8xf32>,
    %c0_65 = arith.constant 0 : index
    %c16 = arith.constant 16 : index
    %108 = vector.load %arg4[%c0_65, %c16] : memref<32x32xbf16, #tpu.memory_space<vmem>>, vector<32x8xbf16>
    %cst_66 = arith.constant dense<0.000000e+00> : vector<16x8xf32>
    %109 = tpu.matmul %30, %108, %cst_66 {dimension_numbers = #tpu.dot_dimension_numbers<[1], [0], [0], [1], [0, 0, 1, 1], [], []>} : vector<16x32xbf16>, vector<32x8xbf16>, vector<16x8xf32> -> vector<16x8xf32>
    %c0_67 = arith.constant 0 : index
    %c16_68 = arith.constant 16 : index
    %110 = vector.load %arg5[%c0_67, %c16_68] : memref<1x32xf32, #tpu.memory_space<vmem>>, vector<1x8xf32>
    %111 = vector.broadcast %110 : vector<1x8xf32> to vector<16x8xf32>
    %112 = arith.addf %109, %111 : vector<16x8xf32>
    %c0_69 = arith.constant 0 : index
    %c16_70 = arith.constant 16 : index
    %113 = vector.load %arg6[%c0_69, %c16_70] : memref<32x32xbf16, #tpu.memory_space<vmem>>, vector<32x8xbf16>
    %cst_71 = arith.constant dense<0.000000e+00> : vector<16x8xf32>
    %114 = tpu.matmul %30, %113, %cst_71 {dimension_numbers = #tpu.dot_dimension_numbers<[1], [0], [0], [1], [0, 0, 1, 1], [], []>} : vector<16x32xbf16>, vector<32x8xbf16>, vector<16x8xf32> -> vector<16x8xf32>
    %c0_72 = arith.constant 0 : index
    %c16_73 = arith.constant 16 : index
    %115 = vector.load %arg7[%c0_72, %c16_73] : memref<1x32xf32, #tpu.memory_space<vmem>>, vector<1x8xf32>
    %116 = vector.broadcast %115 : vector<1x8xf32> to vector<16x8xf32>
    %117 = arith.addf %114, %116 : vector<16x8xf32>
    %118 = vector.shape_cast %112 : vector<16x8xf32> to vector<2x8x8xf32>
    %119 = arith.truncf %118 : vector<2x8x8xf32> to vector<2x8x8xbf16>
    %120 = vector.shape_cast %117 : vector<16x8xf32> to vector<2x8x8xf32>
    %121 = arith.truncf %120 : vector<2x8x8xf32> to vector<2x8x8xbf16>
    "tpu.trace_start"() <{level = 10 : i32, message = "bqd,bkd->bqk"}> : () -> ()
    %cst_74 = arith.constant dense<0.000000e+00> : vector<2x8x8xf32>
    %122 = tpu.matmul %119, %121, %cst_74 {dimension_numbers = #tpu.dot_dimension_numbers<[2], [2], [1], [1], [0, 0, 0, 1, 1, 1], [0], [0]>} : vector<2x8x8xbf16>, vector<2x8x8xbf16>, vector<2x8x8xf32> -> vector<2x8x8xf32>
    "tpu.trace_stop"() : () -> ()
    %cst_75 = arith.constant 0.353553385 : f32
    %123 = vector.broadcast %cst_75 : f32 to vector<2x8x8xf32>
    %124 = arith.mulf %122, %123 : vector<2x8x8xf32>
    %cst_76 = arith.constant 0.000000e+00 : f32
    %125 = vector.broadcast %cst_76 : f32 to vector<2x1x8xf32>
    %126 = arith.cmpf oeq, %31, %125 : vector<2x1x8xf32>
    %cst_77 = arith.constant -1.000000e+09 : f32
    %127 = vector.shape_cast %126 : vector<2x1x8xi1> to vector<2x1x8xi1>
    %128 = vector.broadcast %127 : vector<2x1x8xi1> to vector<2x8x8xi1>
    %129 = vector.broadcast %cst_77 : f32 to vector<2x8x8xf32>
    %130 = arith.select %128, %129, %124 : vector<2x8x8xi1>, vector<2x8x8xf32>
    %c0_78 = arith.constant 0 : index
    %c0_79 = arith.constant 0 : index
    %c0_80 = arith.constant 0 : index
    %131 = vector.load %arg12[%c0_78, %c0_79, %c0_80] : memref<2x8x8xf32, #tpu.memory_space<vmem>>, vector<2x8x8xf32>
    %cst_81 = arith.constant dense<0xFF800000> : vector<2x8xf32>
    %132 = vector.multi_reduction <maximumf>, %130, %cst_81 [2] : vector<2x8x8xf32> to vector<2x8xf32>
    %cst_82 = arith.constant 0xFF800000 : f32
    %133 = vector.broadcast %cst_82 : f32 to vector<2x8xf32>
    %134 = arith.maximumf %133, %132 : vector<2x8xf32>
    %135 = vector.shape_cast %134 : vector<2x8xf32> to vector<2x8x1xf32>
    %136 = vector.broadcast %135 : vector<2x8x1xf32> to vector<2x8x8xf32>
    %137 = arith.subf %130, %136 : vector<2x8x8xf32>
    %138 = math.exp %137 : vector<2x8x8xf32>
    %cst_83 = arith.constant dense<0.000000e+00> : vector<2x8xf32>
    %139 = vector.multi_reduction <add>, %138, %cst_83 [2] : vector<2x8x8xf32> to vector<2x8xf32>
    %140 = vector.shape_cast %139 : vector<2x8xf32> to vector<2x8x1xf32>
    %141 = vector.broadcast %140 : vector<2x8x1xf32> to vector<2x8x8xf32>
    %142 = arith.divf %138, %141 : vector<2x8x8xf32>
    %143 = arith.addf %131, %142 : vector<2x8x8xf32>
    %c0_84 = arith.constant 0 : index
    %c0_85 = arith.constant 0 : index
    %c0_86 = arith.constant 0 : index
    %144 = vector.load %arg12[%c0_84, %c0_85, %c0_86] : memref<2x8x8xf32, #tpu.memory_space<vmem>>, vector<2x8x8xf32>
    tpu.vector_store %arg12[%c0_84, %c0_85, %c0_86], %143 {strides = array<i32>} : memref<2x8x8xf32, #tpu.memory_space<vmem>>, vector<2x8x8xf32>,
    %c0_87 = arith.constant 0 : index
    %c24 = arith.constant 24 : index
    %145 = vector.load %arg4[%c0_87, %c24] : memref<32x32xbf16, #tpu.memory_space<vmem>>, vector<32x8xbf16>
    %cst_88 = arith.constant dense<0.000000e+00> : vector<16x8xf32>
    %146 = tpu.matmul %30, %145, %cst_88 {dimension_numbers = #tpu.dot_dimension_numbers<[1], [0], [0], [1], [0, 0, 1, 1], [], []>} : vector<16x32xbf16>, vector<32x8xbf16>, vector<16x8xf32> -> vector<16x8xf32>
    %c0_89 = arith.constant 0 : index
    %c24_90 = arith.constant 24 : index
    %147 = vector.load %arg5[%c0_89, %c24_90] : memref<1x32xf32, #tpu.memory_space<vmem>>, vector<1x8xf32>
    %148 = vector.broadcast %147 : vector<1x8xf32> to vector<16x8xf32>
    %149 = arith.addf %146, %148 : vector<16x8xf32>
    %c0_91 = arith.constant 0 : index
    %c24_92 = arith.constant 24 : index
    %150 = vector.load %arg6[%c0_91, %c24_92] : memref<32x32xbf16, #tpu.memory_space<vmem>>, vector<32x8xbf16>
    %cst_93 = arith.constant dense<0.000000e+00> : vector<16x8xf32>
    %151 = tpu.matmul %30, %150, %cst_93 {dimension_numbers = #tpu.dot_dimension_numbers<[1], [0], [0], [1], [0, 0, 1, 1], [], []>} : vector<16x32xbf16>, vector<32x8xbf16>, vector<16x8xf32> -> vector<16x8xf32>
    %c0_94 = arith.constant 0 : index
    %c24_95 = arith.constant 24 : index
    %152 = vector.load %arg7[%c0_94, %c24_95] : memref<1x32xf32, #tpu.memory_space<vmem>>, vector<1x8xf32>
    %153 = vector.broadcast %152 : vector<1x8xf32> to vector<16x8xf32>
    %154 = arith.addf %151, %153 : vector<16x8xf32>
    %155 = vector.shape_cast %149 : vector<16x8xf32> to vector<2x8x8xf32>
    %156 = arith.truncf %155 : vector<2x8x8xf32> to vector<2x8x8xbf16>
    %157 = vector.shape_cast %154 : vector<16x8xf32> to vector<2x8x8xf32>
    %158 = arith.truncf %157 : vector<2x8x8xf32> to vector<2x8x8xbf16>
    "tpu.trace_start"() <{level = 10 : i32, message = "bqd,bkd->bqk"}> : () -> ()
    %cst_96 = arith.constant dense<0.000000e+00> : vector<2x8x8xf32>
    %159 = tpu.matmul %156, %158, %cst_96 {dimension_numbers = #tpu.dot_dimension_numbers<[2], [2], [1], [1], [0, 0, 0, 1, 1, 1], [0], [0]>} : vector<2x8x8xbf16>, vector<2x8x8xbf16>, vector<2x8x8xf32> -> vector<2x8x8xf32>
    "tpu.trace_stop"() : () -> ()
    %cst_97 = arith.constant 0.353553385 : f32
    %160 = vector.broadcast %cst_97 : f32 to vector<2x8x8xf32>
    %161 = arith.mulf %159, %160 : vector<2x8x8xf32>
    %cst_98 = arith.constant 0.000000e+00 : f32
    %162 = vector.broadcast %cst_98 : f32 to vector<2x1x8xf32>
    %163 = arith.cmpf oeq, %31, %162 : vector<2x1x8xf32>
    %cst_99 = arith.constant -1.000000e+09 : f32
    %164 = vector.shape_cast %163 : vector<2x1x8xi1> to vector<2x1x8xi1>
    %165 = vector.broadcast %164 : vector<2x1x8xi1> to vector<2x8x8xi1>
    %166 = vector.broadcast %cst_99 : f32 to vector<2x8x8xf32>
    %167 = arith.select %165, %166, %161 : vector<2x8x8xi1>, vector<2x8x8xf32>
    %c0_100 = arith.constant 0 : index
    %c0_101 = arith.constant 0 : index
    %c0_102 = arith.constant 0 : index
    %168 = vector.load %arg12[%c0_100, %c0_101, %c0_102] : memref<2x8x8xf32, #tpu.memory_space<vmem>>, vector<2x8x8xf32>
    %cst_103 = arith.constant dense<0xFF800000> : vector<2x8xf32>
    %169 = vector.multi_reduction <maximumf>, %167, %cst_103 [2] : vector<2x8x8xf32> to vector<2x8xf32>
    %cst_104 = arith.constant 0xFF800000 : f32
    %170 = vector.broadcast %cst_104 : f32 to vector<2x8xf32>
    %171 = arith.maximumf %170, %169 : vector<2x8xf32>
    %172 = vector.shape_cast %171 : vector<2x8xf32> to vector<2x8x1xf32>
    %173 = vector.broadcast %172 : vector<2x8x1xf32> to vector<2x8x8xf32>
    %174 = arith.subf %167, %173 : vector<2x8x8xf32>
    %175 = math.exp %174 : vector<2x8x8xf32>
    %cst_105 = arith.constant dense<0.000000e+00> : vector<2x8xf32>
    %176 = vector.multi_reduction <add>, %175, %cst_105 [2] : vector<2x8x8xf32> to vector<2x8xf32>
    %177 = vector.shape_cast %176 : vector<2x8xf32> to vector<2x8x1xf32>
    %178 = vector.broadcast %177 : vector<2x8x1xf32> to vector<2x8x8xf32>
    %179 = arith.divf %175, %178 : vector<2x8x8xf32>
    %180 = arith.addf %168, %179 : vector<2x8x8xf32>
    %c0_106 = arith.constant 0 : index
    %c0_107 = arith.constant 0 : index
    %c0_108 = arith.constant 0 : index
    %181 = vector.load %arg12[%c0_106, %c0_107, %c0_108] : memref<2x8x8xf32, #tpu.memory_space<vmem>>, vector<2x8x8xf32>
    tpu.vector_store %arg12[%c0_106, %c0_107, %c0_108], %180 {strides = array<i32>} : memref<2x8x8xf32, #tpu.memory_space<vmem>>, vector<2x8x8xf32>,
    %c0_109 = arith.constant 0 : index
    %c0_110 = arith.constant 0 : index
    %c0_111 = arith.constant 0 : index
    %182 = vector.load %arg12[%c0_109, %c0_110, %c0_111] : memref<2x8x8xf32, #tpu.memory_space<vmem>>, vector<2x8x8xf32>
    %cst_112 = arith.constant 2.500000e-01 : f32
    %183 = vector.broadcast %cst_112 : f32 to vector<2x8x8xf32>
    %184 = arith.mulf %182, %183 : vector<2x8x8xf32>
    %c0_113 = arith.constant 0 : index
    %c0_114 = arith.constant 0 : index
    %c0_115 = arith.constant 0 : index
    %185 = vector.load %arg10[%c0_113, %c0_114, %c0_115] : memref<1x8x8xf32, #tpu.memory_space<vmem>>, vector<1x8x8xf32>
    %186 = vector.broadcast %185 : vector<1x8x8xf32> to vector<2x8x8xf32>
    %187 = arith.mulf %184, %186 : vector<2x8x8xf32>
    %188 = arith.subf %184, %187 : vector<2x8x8xf32>
    %189 = vector.broadcast %185 : vector<1x8x8xf32> to vector<2x8x8xf32>
    %190 = arith.addf %188, %189 : vector<2x8x8xf32>
    %c0_116 = arith.constant 0 : index
    %c0_117 = arith.constant 0 : index
    %c0_118 = arith.constant 0 : index
    %191 = vector.load %arg9[%c0_116, %c0_117, %c0_118] : memref<2x8x1xf32, #tpu.memory_space<vmem>>, vector<2x8x1xf32>
    %192 = vector.broadcast %191 : vector<2x8x1xf32> to vector<2x8x8xf32>
    %193 = arith.mulf %192, %190 : vector<2x8x8xf32>
    %c0_119 = arith.constant 0 : index
    %c0_120 = arith.constant 0 : index
    %c0_121 = arith.constant 0 : index
    %194 = vector.load %arg12[%c0_119, %c0_120, %c0_121] : memref<2x8x8xf32, #tpu.memory_space<vmem>>, vector<2x8x8xf32>
    tpu.vector_store %arg12[%c0_119, %c0_120, %c0_121], %193 {strides = array<i32>} : memref<2x8x8xf32, #tpu.memory_space<vmem>>, vector<2x8x8xf32>,
    return
  }
  func.func @transform_0(%arg0: i32) -> (i32, i32, i32) {
    %c0_i32 = arith.constant 0 : i32
    %c0_i32_0 = arith.constant 0 : i32
    %c0_i32_1 = arith.constant 0 : i32
    return %arg0, %c0_i32, %c0_i32_0 : i32, i32, i32
  }
  func.func @transform_1(%arg0: i32) -> (i32, i32) {
    %c0_i32 = arith.constant 0 : i32
    %c0_i32_0 = arith.constant 0 : i32
    %c0_i32_1 = arith.constant 0 : i32
    return %c0_i32, %c0_i32_0 : i32, i32
  }
  func.func @transform_2(%arg0: i32) -> (i32, i32) {
    %c0_i32 = arith.constant 0 : i32
    %c0_i32_0 = arith.constant 0 : i32
    %c0_i32_1 = arith.constant 0 : i32
    return %c0_i32, %c0_i32_0 : i32, i32
  }
  func.func @transform_3(%arg0: i32) -> (i32, i32) {
    %c0_i32 = arith.constant 0 : i32
    %c0_i32_0 = arith.constant 0 : i32
    %c0_i32_1 = arith.constant 0 : i32
    return %c0_i32, %c0_i32_0 : i32, i32
  }
  func.func @transform_4(%arg0: i32) -> (i32, i32) {
    %c0_i32 = arith.constant 0 : i32
    %c0_i32_0 = arith.constant 0 : i32
    %c0_i32_1 = arith.constant 0 : i32
    return %c0_i32, %c0_i32_0 : i32, i32
  }
  func.func @transform_5(%arg0: i32) -> (i32, i32) {
    %c0_i32 = arith.constant 0 : i32
    %c0_i32_0 = arith.constant 0 : i32
    %c0_i32_1 = arith.constant 0 : i32
    return %c0_i32, %c0_i32_0 : i32, i32
  }
  func.func @transform_6(%arg0: i32) -> (i32, i32) {
    %c0_i32 = arith.constant 0 : i32
    %c0_i32_0 = arith.constant 0 : i32
    %c0_i32_1 = arith.constant 0 : i32
    return %c0_i32, %c0_i32_0 : i32, i32
  }
  func.func @transform_7(%arg0: i32) -> (i32, i32, i32) {
    %c0_i32 = arith.constant 0 : i32
    %c0_i32_0 = arith.constant 0 : i32
    %c0_i32_1 = arith.constant 0 : i32
    return %arg0, %c0_i32, %c0_i32_0 : i32, i32, i32
  }
  func.func @transform_8(%arg0: i32) -> (i32, i32, i32) {
    %c0_i32 = arith.constant 0 : i32
    %c0_i32_0 = arith.constant 0 : i32
    %c0_i32_1 = arith.constant 0 : i32
    return %arg0, %c0_i32, %c0_i32_0 : i32, i32, i32
  }
  func.func @transform_9(%arg0: i32) -> (i32, i32, i32) {
    %c0_i32 = arith.constant 0 : i32
    %c0_i32_0 = arith.constant 0 : i32
    %c0_i32_1 = arith.constant 0 : i32
    %c0_i32_2 = arith.constant 0 : i32
    return %c0_i32, %c0_i32_0, %c0_i32_1 : i32, i32, i32
  }
  func.func @transform_10(%arg0: i32) -> (i32, i32, i32) {
    %c0_i32 = arith.constant 0 : i32
    %c0_i32_0 = arith.constant 0 : i32
    %c0_i32_1 = arith.constant 0 : i32
    return %arg0, %c0_i32, %c0_i32_0 : i32, i32, i32
  }
  func.func @transform_11(%arg0: i32) -> (i32, i32, i32) {
    %c0_i32 = arith.constant 0 : i32
    %c0_i32_0 = arith.constant 0 : i32
    %c0_i32_1 = arith.constant 0 : i32
    return %arg0, %c0_i32, %c0_i32_0 : i32, i32, i32
  }
}

</mosaic_0001>

<llo_original>
// kernel: tpu_custom_call.1
$region0: #{tpu_custom_call.1}
  #allocation0 [shape = 'u32[]', space=smem, size = 0x4, offset = 0x4, fixed_abs, tag = 'smem constant byte address 0x4 - core index']
  #allocation1 [shape = 'u32[144,128]{1,0:T(1,128)}', space=vmem, size = 0x12000, scoped, tag = 'internal scratch']
  %s0 = inlined_call_operand.vmem [shape: f32[2,8,32], index: 0, kind: input, shape index: {}]
  %s1 = inlined_call_operand.hbm [shape: f32[1,32], index: 1, kind: input, shape index: {}]
  %s2 = inlined_call_operand.hbm [shape: f32[1,32], index: 2, kind: input, shape index: {}]
  %s3 = inlined_call_operand.hbm [shape: bf16[32,32], index: 3, kind: input, shape index: {}]
  %s4 = inlined_call_operand.hbm [shape: f32[1,32], index: 4, kind: input, shape index: {}]
  %s5 = inlined_call_operand.hbm [shape: bf16[32,32], index: 5, kind: input, shape index: {}]
  %s6 = inlined_call_operand.hbm [shape: f32[1,32], index: 6, kind: input, shape index: {}]
  %s7 = inlined_call_operand.vmem [shape: f32[2,1,8], index: 7, kind: input, shape index: {}]
  %s8 = inlined_call_operand.vmem [shape: f32[2,8,1], index: 8, kind: input, shape index: {}]
  %s9 = inlined_call_operand.vmem [shape: f32[1,8,8], index: 9, kind: input, shape index: {}]
  %s10 = inlined_call_operand.hbm [shape: f32[2,8,32], index: 10, kind: output, shape index: {0}]
  %s11 = inlined_call_operand.hbm [shape: f32[2,8,8], index: 11, kind: output, shape index: {1}]
  %12 = xla_tuple %s10, %s11
  %s13 = sld [smem:[#allocation0]]
  $region82: #{tpu_custom_call.1} parent=0
    _
  %s15 = ssub.s32 1, %s13
  %s16 = scalar_select 0, %s15, %s13
  $region1: #{tpu_custom_call.1} parent=0
    #allocation2 [shape = 'u8[512]{0}', space=vmem, size = 0x400, scoped, tag = 'input window, operand 1, single buffered']
    #allocation3 [shape = 's32[1]{0}', space=sflag, size = 0x4, scoped, tag = 'scoped memory for tpu_custom_call.1']
    #allocation4 [shape = 's32[1]{0}', space=sflag, size = 0x4, scoped, tag = 'scoped memory for tpu_custom_call.1']
    #allocation5 [shape = 'u8[512]{0}', space=vmem, size = 0x400, scoped, tag = 'input window, operand 2, single buffered']
    #allocation6 [shape = 's32[1]{0}', space=sflag, size = 0x4, scoped, tag = 'scoped memory for tpu_custom_call.1']
    #allocation7 [shape = 'u8[8192]{0}', space=vmem, size = 0x2000, scoped, tag = 'input window, operand 3, single buffered']
    #allocation8 [shape = 'u8[512]{0}', space=vmem, size = 0x400, scoped, tag = 'input window, operand 4, single buffered']
    #allocation9 [shape = 's32[1]{0}', space=sflag, size = 0x4, scoped, tag = 'scoped memory for tpu_custom_call.1']
    #allocation10 [shape = 'u8[8192]{0}', space=vmem, size = 0x2000, scoped, tag = 'input window, operand 5, single buffered']
    #allocation11 [shape = 'u8[512]{0}', space=vmem, size = 0x400, scoped, tag = 'input window, operand 6, single buffered']
    #allocation12 [shape = 's32[1]{0}', space=sflag, size = 0x4, scoped, tag = 'scoped memory for tpu_custom_call.1']
    #allocation13 [shape = 'u8[8192]{0}', space=vmem, size = 0x2000, scoped, tag = 'output window, operand 0, single buffered']
    #allocation14 [shape = 'u8[8192]{0}', space=vmem, size = 0x2000, scoped, tag = 'output window, operand 1, single buffered']
    #allocation15 [shape = 's32[1]{0}', space=sflag, size = 0x4, scoped, tag = 'scoped memory for tpu_custom_call.1']
    %17 = vsyncpa [#allocation3], 0
    %18 = vsyncpa [#allocation6], 0
    %19 = vsyncpa [#allocation9], 0
    %20 = vsyncpa [#allocation12], 0
    %21 = vsyncpa [#allocation4], 0
    %22 = vsyncpa [#allocation15], 0
    // Predicated region
    $region2: #{tpu_custom_call.1} parent=1 // pred_check
      _
    $region3: #{tpu_custom_call.1} parent=1 // pred_check_branch
      %24 = sbr.rel (0) target = $region5
    $region4: #{tpu_custom_call.1} parent=1 // pred_region
      _
    $region5: #{tpu_custom_call.1} parent=1 // pred_fallthru
      _
    // Predicated region
    $region6: #{tpu_custom_call.1} parent=1 // pred_check
      _
    $region7: #{tpu_custom_call.1} parent=1 // pred_check_branch
      %26 = sbr.rel (0) target = $region9
    $region8: #{tpu_custom_call.1} parent=1 // pred_region
      %s28 = ssub.s32 16, 16
      %29 = vsyncadd [#allocation3], %s28
      %s31 = sshll.u32 [#allocation2], 4
      %s32 = int_to_ptr.vmem [resolvable:$true] %s31
      %34 = dma.hbm_to_vmem [thread:$0]  %s1, 16, %s32, [#allocation3]
    $region9: #{tpu_custom_call.1} parent=1 // pred_fallthru
      _
    // Predicated region
    $region10: #{tpu_custom_call.1} parent=1 // pred_check
      _
    $region11: #{tpu_custom_call.1} parent=1 // pred_check_branch
      %36 = sbr.rel (0) target = $region13
    $region12: #{tpu_custom_call.1} parent=1 // pred_region
      %s38 = ssub.s32 16, 16
      %39 = vsyncadd [#allocation6], %s38
      %s41 = sshll.u32 [#allocation5], 4
      %s42 = int_to_ptr.vmem [resolvable:$true] %s41
      %44 = dma.hbm_to_vmem [thread:$0]  %s2, 16, %s42, [#allocation6]
    $region13: #{tpu_custom_call.1} parent=1 // pred_fallthru
      _
    // Predicated region
    $region14: #{tpu_custom_call.1} parent=1 // pred_check
      _
    $region15: #{tpu_custom_call.1} parent=1 // pred_check_branch
      %46 = sbr.rel (0) target = $region17
    $region16: #{tpu_custom_call.1} parent=1 // pred_region
      %s48 = ssub.s32 256, 256
      %49 = vsyncadd [#allocation6], %s48
      %s50 = sshll.u32 [#allocation7], 4
      %s51 = int_to_ptr.vmem [resolvable:$true] %s50
      %56 = dma.hbm_to_vmem [thread:$0]  %s3, 256, %s51, [#allocation6], 64, 64, 4
    $region17: #{tpu_custom_call.1} parent=1 // pred_fallthru
      _
    // Predicated region
    $region18: #{tpu_custom_call.1} parent=1 // pred_check
      _
    $region19: #{tpu_custom_call.1} parent=1 // pred_check_branch
      %58 = sbr.rel (0) target = $region21
    $region20: #{tpu_custom_call.1} parent=1 // pred_region
      %s60 = ssub.s32 16, 16
      %61 = vsyncadd [#allocation9], %s60
      %s63 = sshll.u32 [#allocation8], 4
      %s64 = int_to_ptr.vmem [resolvable:$true] %s63
      %66 = dma.hbm_to_vmem [thread:$0]  %s4, 16, %s64, [#allocation9]
    $region21: #{tpu_custom_call.1} parent=1 // pred_fallthru
      _
    // Predicated region
    $region22: #{tpu_custom_call.1} parent=1 // pred_check
      _
    $region23: #{tpu_custom_call.1} parent=1 // pred_check_branch
      %68 = sbr.rel (0) target = $region25
    $region24: #{tpu_custom_call.1} parent=1 // pred_region
      %s70 = ssub.s32 256, 256
      %71 = vsyncadd [#allocation9], %s70
      %s72 = sshll.u32 [#allocation10], 4
      %s73 = int_to_ptr.vmem [resolvable:$true] %s72
      %78 = dma.hbm_to_vmem [thread:$0]  %s5, 256, %s73, [#allocation9], 64, 64, 4
    $region25: #{tpu_custom_call.1} parent=1 // pred_fallthru
      _
    // Predicated region
    $region26: #{tpu_custom_call.1} parent=1 // pred_check
      _
    $region27: #{tpu_custom_call.1} parent=1 // pred_check_branch
      %80 = sbr.rel (0) target = $region29
    $region28: #{tpu_custom_call.1} parent=1 // pred_region
      %s82 = ssub.s32 16, 16
      %83 = vsyncadd [#allocation12], %s82
      %s85 = sshll.u32 [#allocation11], 4
      %s86 = int_to_ptr.vmem [resolvable:$true] %s85
      %88 = dma.hbm_to_vmem [thread:$0]  %s6, 16, %s86, [#allocation12]
    $region29: #{tpu_custom_call.1} parent=1 // pred_fallthru
      _
    // Predicated region
    $region30: #{tpu_custom_call.1} parent=1 // pred_check
      _
    $region31: #{tpu_custom_call.1} parent=1 // pred_check_branch
      %90 = sbr.rel (0) target = $region33
    $region32: #{tpu_custom_call.1} parent=1 // pred_region
      _
    $region33: #{tpu_custom_call.1} parent=1 // pred_fallthru
      _
    // Predicated region
    $region34: #{tpu_custom_call.1} parent=1 // pred_check
      _
    $region35: #{tpu_custom_call.1} parent=1 // pred_check_branch
      %92 = sbr.rel (0) target = $region37
    $region36: #{tpu_custom_call.1} parent=1 // pred_region
      _
    $region37: #{tpu_custom_call.1} parent=1 // pred_fallthru
      _
    // Predicated region
    $region38: #{tpu_custom_call.1} parent=1 // pred_check
      _
    $region39: #{tpu_custom_call.1} parent=1 // pred_check_branch
      %94 = sbr.rel (0) target = $region41
    $region40: #{tpu_custom_call.1} parent=1 // pred_region
      _
    $region41: #{tpu_custom_call.1} parent=1 // pred_fallthru
      _
    // Predicated region
    $region42: #{tpu_custom_call.1} parent=1 // pred_check
      _
    $region43: #{tpu_custom_call.1} parent=1 // pred_check_branch
      %96 = sbr.rel (0) target = $region45
    $region44: #{tpu_custom_call.1} parent=1 // pred_region
      %97 = dma.done [#allocation3], 16
    $region45: #{tpu_custom_call.1} parent=1 // pred_fallthru
      _
    // Predicated region
    $region46: #{tpu_custom_call.1} parent=1 // pred_check
      _
    $region47: #{tpu_custom_call.1} parent=1 // pred_check_branch
      %99 = sbr.rel (0) target = $region49
    $region48: #{tpu_custom_call.1} parent=1 // pred_region
      %100 = dma.done [#allocation6], 16
    $region49: #{tpu_custom_call.1} parent=1 // pred_fallthru
      _
    // Predicated region
    $region50: #{tpu_custom_call.1} parent=1 // pred_check
      _
    $region51: #{tpu_custom_call.1} parent=1 // pred_check_branch
      %102 = sbr.rel (0) target = $region53
    $region52: #{tpu_custom_call.1} parent=1 // pred_region
      %103 = dma.done [#allocation6], 256
    $region53: #{tpu_custom_call.1} parent=1 // pred_fallthru
      _
    // Predicated region
    $region54: #{tpu_custom_call.1} parent=1 // pred_check
      _
    $region55: #{tpu_custom_call.1} parent=1 // pred_check_branch
      %105 = sbr.rel (0) target = $region57
    $region56: #{tpu_custom_call.1} parent=1 // pred_region
      %106 = dma.done [#allocation9], 16
    $region57: #{tpu_custom_call.1} parent=1 // pred_fallthru
      _
    // Predicated region
    $region58: #{tpu_custom_call.1} parent=1 // pred_check
      _
    $region59: #{tpu_custom_call.1} parent=1 // pred_check_branch
      %108 = sbr.rel (0) target = $region61
    $region60: #{tpu_custom_call.1} parent=1 // pred_region
      %109 = dma.done [#allocation9], 256
    $region61: #{tpu_custom_call.1} parent=1 // pred_fallthru
      _
    // Predicated region
    $region62: #{tpu_custom_call.1} parent=1 // pred_check
      _
    $region63: #{tpu_custom_call.1} parent=1 // pred_check_branch
      %111 = sbr.rel (0) target = $region65
    $region64: #{tpu_custom_call.1} parent=1 // pred_region
      %112 = dma.done [#allocation12], 16
    $region65: #{tpu_custom_call.1} parent=1 // pred_fallthru
      _
    %v114 = vld [vmem:[%s0] sm:$0xff]
    %v115 = vld [vmem:[%s0 + $0x8] sm:$0xff]
    %vm116 = vcmask 261120
    %v117 = vsel %vm116, %v114, 0.0
    %118 = vadd.xlane.f32.xlu0 %v117
    %v119 = vpop.xlane.xlu0 %118
    %v120 = vsel %vm116, %v115, 0.0
    %121 = vadd.xlane.f32.xlu0 %v120
    %v122 = vpop.xlane.xlu0 %121
    %v123 = vrcp.pop 32.0
    %v124 = vmul.f32 %v119, %v123
    %v125 = vmul.f32 %v122, %v123
    %v126 = vsub.f32 %v114, %v124
    %v127 = vsub.f32 %v115, %v125
    %v128 = vmul.f32 %v126, %v126
    %v129 = vmul.f32 %v127, %v127
    %v130 = vsel %vm116, %v128, 0.0
    %131 = vadd.xlane.f32.xlu0 %v130
    %v132 = vpop.xlane.xlu0 %131
    %v133 = vsel %vm116, %v129, 0.0
    %134 = vadd.xlane.f32.xlu0 %v133
    %v135 = vpop.xlane.xlu0 %134
    %v136 = vrcp.pop 31.0
    %v137 = vmul.f32 %v132, %v136
    %v138 = vmul.f32 %v135, %v136
    %v139 = vrsqrt.pop %v137
    %v140 = vmul.f32 %v137, %v139
    %vm141 = vcmp.eq.f32.partialorder %v137, inf
    %v142 = vsel %vm141, %v137, %v140
    %vm143 = vcmp.eq.f32.partialorder %v137, 0.0
    %v144 = vand.u32 %v137, 2147483648
    %v145 = vsel %vm143, %v144, %v142
    %v146 = vrsqrt.pop %v138
    %v147 = vmul.f32 %v138, %v146
    %vm148 = vcmp.eq.f32.partialorder %v138, inf
    %v149 = vsel %vm148, %v138, %v147
    %vm150 = vcmp.eq.f32.partialorder %v138, 0.0
    %v151 = vand.u32 %v138, 2147483648
    %v152 = vsel %vm150, %v151, %v149
    %v153 = vadd.f32 %v145, 1e-06
    %v154 = vadd.f32 %v152, 1e-06
    %v155 = vrcp.pop %v153
    %v156 = vrcp.pop %v154
    %v157 = vld [vmem:[#allocation2] sm:$0x1]
    %v159 = vlaneseq
    %v160 = vshrl.u32 %v159, 7
    %v161 = vsub.s32 0, %v160
    %v162 = vrot.slane %v157, %v161
    %v164 = vmul.f32 %v162, %v126
    %v165 = vmul.f32 %v162, %v127
    %v166 = vmul.f32 %v164, %v155
    %v167 = vmul.f32 %v165, %v156
    %v168 = vld [vmem:[#allocation5] sm:$0x1]
    %v170 = vlaneseq
    %v171 = vshrl.u32 %v170, 7
    %v172 = vsub.s32 0, %v171
    %v173 = vrot.slane %v168, %v172
    %v175 = vadd.f32 %v166, %v173
    %v176 = vadd.f32 %v167, %v173
    %177 = vst.msk [vmem:[#allocation13] sm:$0xff] %vm116, %v175
    %178 = vst.msk [vmem:[#allocation13 + $0x8] sm:$0xff] %vm116, %v176
    %v179 = vpack.c.bf16 %v176, %v175
    %v180 = vld [vmem:[%s7] sm:$0x1]
    %v181 = vld [vmem:[%s7 + $0x1] sm:$0x1]
    %vm182 = vcmask 64512
    %183 = vst.msk [vmem:[#allocation14] sm:$0xff] %vm182, 0.0
    %184 = vst.msk [vmem:[#allocation14 + $0x8] sm:$0xff] %vm182, 0.0
    %v185 = vld [vmem:[#allocation7] sm:$0xf]
    %v186 = vld [vmem:[#allocation7 + $0x4] sm:$0xf]
    %v187 = vld [vmem:[#allocation7 + $0x8] sm:$0xf]
    %v188 = vld [vmem:[#allocation7 + $0xc] sm:$0xf]
    %v189 = vld [vmem:[#allocation8] sm:$0x1]
    %v191 = vlaneseq
    %v192 = vshrl.u32 %v191, 7
    %v193 = vsub.s32 0, %v192
    %v194 = vrot.slane %v189, %v193
    %v200 = vunpack.c.l.b16 %v185
    %v201 = vunpack.c.l.b16 %v186
    %v202 = vunpack.c.l.b16 %v187
    %v203 = vunpack.c.l.b16 %v188
    %v204 = vpack.c.b16 %v201, %v200
    %v205 = vpack.c.b16 %v203, %v202
    %v209 = vsel %vm116, %v179, 0
    %211 = vmatprep.subr.bf16.mxu0 0
    %212 = vmatpush1.bf16.msra.mxu0 0
    %213 = vmatprep.subr.bf16.mxu0 0
    %214 = vmatpush1.bf16.msra.mxu0 0
    %215 = vmatprep.subr.bf16.mxu0 0
    %216 = vmatpush1.bf16.msra.mxu0 0
    %217 = vmatprep.subr.bf16.mxu0 0
    %218 = vmatpush1.bf16.msra.mxu0 0
    %219 = vmatprep.subr.bf16.mxu0 0
    %220 = vmatpush1.bf16.msra.mxu0 0
    %221 = vmatprep.subr.bf16.mxu0 0
    %222 = vmatpush1.bf16.msra.mxu0 0
    %223 = vmatprep.subr.bf16.mxu0 0
    %224 = vmatpush1.bf16.msra.mxu0 %v205
    %225 = vmatprep.subr.bf16.mxu0 0
    %226 = vmatpush1.bf16.msra.mxu0 %v204
    %227 = vmatprep.subr.bf16.mxu0 0
    %228 = vmatpush2.bf16.msra.mxu0 0
    %229 = vmatprep.subr.bf16.mxu0 0
    %230 = vmatpush2.bf16.msra.mxu0 0
    %231 = vmatprep.subr.bf16.mxu0 0
    %232 = vmatpush2.bf16.msra.mxu0 0
    %233 = vmatprep.subr.bf16.mxu0 0
    %234 = vmatpush2.bf16.msra.mxu0 0
    %235 = vmatprep.subr.bf16.mxu0 0
    %236 = vmatpush2.bf16.msra.mxu0 0
    %237 = vmatprep.subr.bf16.mxu0 0
    %238 = vmatpush2.bf16.msra.mxu0 0
    %239 = vmatprep.subr.bf16.mxu0 0
    %240 = vmatpush2.bf16.msra.mxu0 0
    %241 = vmatprep.subr.bf16.mxu0 0
    %242 = vmatpush2.bf16.msra.mxu0 0
    %243 = vmatprep.mubr.bf16.mxu0 0
    %244 = vmatmul.mubr.bf16.gmra.mxu0 %v209
    %v245 = vpop.f32.mrf.mxu0
    %v246 = vadd.f32 %v194, %v245
    %v247 = vpop.f32.mrf.mxu0
    %v248 = vpop.f32.mrf.mxu0
    %v249 = vadd.f32 %v194, %v248
    %v250 = vpop.f32.mrf.mxu0
    %251 = vdwg.mxu0
    %v252 = vld [vmem:[#allocation10] sm:$0xf]
    %v253 = vld [vmem:[#allocation10 + $0x4] sm:$0xf]
    %v254 = vld [vmem:[#allocation10 + $0x8] sm:$0xf]
    %v255 = vld [vmem:[#allocation10 + $0xc] sm:$0xf]
    %v256 = vld [vmem:[#allocation11] sm:$0x1]
    %v258 = vlaneseq
    %v259 = vshrl.u32 %v258, 7
    %v260 = vsub.s32 0, %v259
    %v261 = vrot.slane %v256, %v260
    %v267 = vunpack.c.l.b16 %v252
    %v268 = vunpack.c.l.b16 %v253
    %v269 = vunpack.c.l.b16 %v254
    %v270 = vunpack.c.l.b16 %v255
    %v271 = vpack.c.b16 %v268, %v267
    %v272 = vpack.c.b16 %v270, %v269
    %275 = vmatprep.subr.bf16.mxu0 0
    %276 = vmatpush1.bf16.msra.mxu0 0
    %277 = vmatprep.subr.bf16.mxu0 0
    %278 = vmatpush1.bf16.msra.mxu0 0
    %279 = vmatprep.subr.bf16.mxu0 0
    %280 = vmatpush1.bf16.msra.mxu0 0
    %281 = vmatprep.subr.bf16.mxu0 0
    %282 = vmatpush1.bf16.msra.mxu0 0
    %283 = vmatprep.subr.bf16.mxu0 0
    %284 = vmatpush1.bf16.msra.mxu0 0
    %285 = vmatprep.subr.bf16.mxu0 0
    %286 = vmatpush1.bf16.msra.mxu0 0
    %287 = vmatprep.subr.bf16.mxu0 0
    %288 = vmatpush1.bf16.msra.mxu0 %v272
    %289 = vmatprep.subr.bf16.mxu0 0
    %290 = vmatpush1.bf16.msra.mxu0 %v271
    %291 = vmatprep.subr.bf16.mxu0 0
    %292 = vmatpush2.bf16.msra.mxu0 0
    %293 = vmatprep.subr.bf16.mxu0 0
    %294 = vmatpush2.bf16.msra.mxu0 0
    %295 = vmatprep.subr.bf16.mxu0 0
    %296 = vmatpush2.bf16.msra.mxu0 0
    %297 = vmatprep.subr.bf16.mxu0 0
    %298 = vmatpush2.bf16.msra.mxu0 0
    %299 = vmatprep.subr.bf16.mxu0 0
    %300 = vmatpush2.bf16.msra.mxu0 0
    %301 = vmatprep.subr.bf16.mxu0 0
    %302 = vmatpush2.bf16.msra.mxu0 0
    %303 = vmatprep.subr.bf16.mxu0 0
    %304 = vmatpush2.bf16.msra.mxu0 0
    %305 = vmatprep.subr.bf16.mxu0 0
    %306 = vmatpush2.bf16.msra.mxu0 0
    %307 = vmatprep.mubr.bf16.mxu0 0
    %308 = vmatmul.mubr.bf16.gmra.mxu0 %v209
    %v309 = vpop.f32.mrf.mxu0
    %v310 = vadd.f32 %v261, %v309
    %v311 = vpop.f32.mrf.mxu0
    %v312 = vpop.f32.mrf.mxu0
    %v313 = vadd.f32 %v261, %v312
    %v314 = vpop.f32.mrf.mxu0
    %315 = vdwg.mxu0
    %v316 = vpack.c.bf16 %v246, %v246
    %v317 = vpack.c.bf16 %v249, %v249
    %v318 = vpack.c.bf16 %v310, %v310
    %v319 = vpack.c.bf16 %v313, %v313
    %v321 = vsel %vm182, %v316, 0
    %v324 = vsel %vm182, %v318, 0
    %326 = vmatprep.subr.bf16.mxu0 0
    %327 = vmatpush1.bf16.xpose.msra.mxu0 0
    %328 = vmatprep.subr.bf16.mxu0 0
    %329 = vmatpush1.bf16.xpose.msra.mxu0 0
    %330 = vmatprep.subr.bf16.mxu0 0
    %331 = vmatpush1.bf16.xpose.msra.mxu0 0
    %332 = vmatprep.subr.bf16.mxu0 0
    %333 = vmatpush1.bf16.xpose.msra.mxu0 0
    %334 = vmatprep.subr.bf16.mxu0 0
    %335 = vmatpush1.bf16.xpose.msra.mxu0 0
    %336 = vmatprep.subr.bf16.mxu0 0
    %337 = vmatpush1.bf16.xpose.msra.mxu0 0
    %338 = vmatprep.subr.bf16.mxu0 0
    %339 = vmatpush1.bf16.xpose.msra.mxu0 0
    %340 = vmatprep.subr.bf16.mxu0 0
    %341 = vmatpush1.bf16.xpose.msra.mxu0 %v324
    %342 = vmatprep.subr.bf16.mxu0 0
    %343 = vmatpush2.bf16.xpose.msra.mxu0 0
    %344 = vmatprep.subr.bf16.mxu0 0
    %345 = vmatpush2.bf16.xpose.msra.mxu0 0
    %346 = vmatprep.subr.bf16.mxu0 0
    %347 = vmatpush2.bf16.xpose.msra.mxu0 0
    %348 = vmatprep.subr.bf16.mxu0 0
    %349 = vmatpush2.bf16.xpose.msra.mxu0 0
    %350 = vmatprep.subr.bf16.mxu0 0
    %351 = vmatpush2.bf16.xpose.msra.mxu0 0
    %352 = vmatprep.subr.bf16.mxu0 0
    %353 = vmatpush2.bf16.xpose.msra.mxu0 0
    %354 = vmatprep.subr.bf16.mxu0 0
    %355 = vmatpush2.bf16.xpose.msra.mxu0 0
    %356 = vmatprep.subr.bf16.mxu0 0
    %357 = vmatpush2.bf16.xpose.msra.mxu0 0
    %358 = vmatprep.mubr.bf16.mxu0 0
    %359 = vmatmul.mubr.bf16.gmra.mxu0 %v321
    %v360 = vpop.f32.mrf.mxu0
    %v361 = vadd.f32 0.0, %v360
    %v362 = vpop.f32.mrf.mxu0
    %v363 = vpop.f32.mrf.mxu0
    %v364 = vpop.f32.mrf.mxu0
    %365 = vdwg.mxu0
    %v367 = vsel %vm182, %v317, 0
    %v370 = vsel %vm182, %v319, 0
    %372 = vmatprep.subr.bf16.mxu0 0
    %373 = vmatpush1.bf16.xpose.msra.mxu0 0
    %374 = vmatprep.subr.bf16.mxu0 0
    %375 = vmatpush1.bf16.xpose.msra.mxu0 0
    %376 = vmatprep.subr.bf16.mxu0 0
    %377 = vmatpush1.bf16.xpose.msra.mxu0 0
    %378 = vmatprep.subr.bf16.mxu0 0
    %379 = vmatpush1.bf16.xpose.msra.mxu0 0
    %380 = vmatprep.subr.bf16.mxu0 0
    %381 = vmatpush1.bf16.xpose.msra.mxu0 0
    %382 = vmatprep.subr.bf16.mxu0 0
    %383 = vmatpush1.bf16.xpose.msra.mxu0 0
    %384 = vmatprep.subr.bf16.mxu0 0
    %385 = vmatpush1.bf16.xpose.msra.mxu0 0
    %386 = vmatprep.subr.bf16.mxu0 0
    %387 = vmatpush1.bf16.xpose.msra.mxu0 %v370
    %388 = vmatprep.subr.bf16.mxu0 0
    %389 = vmatpush2.bf16.xpose.msra.mxu0 0
    %390 = vmatprep.subr.bf16.mxu0 0
    %391 = vmatpush2.bf16.xpose.msra.mxu0 0
    %392 = vmatprep.subr.bf16.mxu0 0
    %393 = vmatpush2.bf16.xpose.msra.mxu0 0
    %394 = vmatprep.subr.bf16.mxu0 0
    %395 = vmatpush2.bf16.xpose.msra.mxu0 0
    %396 = vmatprep.subr.bf16.mxu0 0
    %397 = vmatpush2.bf16.xpose.msra.mxu0 0
    %398 = vmatprep.subr.bf16.mxu0 0
    %399 = vmatpush2.bf16.xpose.msra.mxu0 0
    %400 = vmatprep.subr.bf16.mxu0 0
    %401 = vmatpush2.bf16.xpose.msra.mxu0 0
    %402 = vmatprep.subr.bf16.mxu0 0
    %403 = vmatpush2.bf16.xpose.msra.mxu0 0
    %404 = vmatprep.mubr.bf16.mxu0 0
    %405 = vmatmul.mubr.bf16.gmra.mxu0 %v367
    %v406 = vpop.f32.mrf.mxu0
    %v407 = vadd.f32 0.0, %v406
    %v408 = vpop.f32.mrf.mxu0
    %v409 = vpop.f32.mrf.mxu0
    %v410 = vpop.f32.mrf.mxu0
    %411 = vdwg.mxu0
    %v412 = vmul.f32 %v361, 0.35355338
    %v413 = vmul.f32 %v407, 0.35355338
    %vm414 = vcmp.eq.f32.partialorder %v180, 0.0
    %vm415 = vcmp.eq.f32.partialorder %v181, 0.0
    %v416 = vsel %vm414, 1, 0
    %v417 = vsel %vm415, 1, 0
    %v418 = vlaneseq
    %v419 = vshrl.u32 %v418, 7
    %v420 = vsub.s32 0, %v419
    %v421 = vrot.slane %v416, %v420
    %v422 = vlaneseq
    %v423 = vshrl.u32 %v422, 7
    %v424 = vsub.s32 0, %v423
    %v425 = vrot.slane %v417, %v424
    %vm426 = vcmp.eq.s32.totalorder %v421, 1
    %vm427 = vcmp.eq.s32.totalorder %v425, 1
    %v428 = vsel %vm426, -1e+09, %v412
    %v429 = vsel %vm427, -1e+09, %v413
    %v430 = vld [vmem:[#allocation14] sm:$0xff]
    %v431 = vld [vmem:[#allocation14 + $0x8] sm:$0xff]
    %v432 = vsel %vm182, %v428, -inf
    %433 = vmax.xlane.f32.xlu0 %v432
    %v434 = vpop.xlane.xlu0 %433
    %v435 = vsel %vm182, %v429, -inf
    %436 = vmax.xlane.f32.xlu0 %v435
    %v437 = vpop.xlane.xlu0 %436
    %v438 = vsub.f32 %v428, %v434
    %v439 = vsub.f32 %v429, %v437
    %v440 = vmul.f32 %v438, 1.442695
    %v441 = vpow.pop %v440
    %v442 = vmul.f32 %v439, 1.442695
    %v443 = vpow.pop %v442
    %v444 = vsel %vm182, %v441, 0.0
    %445 = vadd.xlane.f32.xlu0 %v444
    %v446 = vpop.xlane.xlu0 %445
    %v447 = vsel %vm182, %v443, 0.0
    %448 = vadd.xlane.f32.xlu0 %v447
    %v449 = vpop.xlane.xlu0 %448
    %v450 = vrcp.pop %v446
    %v451 = vmul.f32 %v441, %v450
    %v452 = vrcp.pop %v449
    %v453 = vmul.f32 %v443, %v452
    %v454 = vadd.f32 %v430, %v451
    %v455 = vadd.f32 %v431, %v453
    %456 = vst.msk [vmem:[#allocation14] sm:$0xff] %vm182, %v454
    %457 = vst.msk [vmem:[#allocation14 + $0x8] sm:$0xff] %vm182, %v455
    %v458 = vld [vmem:[#allocation7] sm:$0xf]
    %v459 = vld [vmem:[#allocation7 + $0x4] sm:$0xf]
    %v460 = vld [vmem:[#allocation7 + $0x8] sm:$0xf]
    %v461 = vld [vmem:[#allocation7 + $0xc] sm:$0xf]
    %v462 = vld [vmem:[#allocation8] sm:$0x1]
    %v464 = vlaneseq
    %v465 = vshrl.u32 %v464, 7
    %v466 = vsub.s32 0, %v465
    %v467 = vrot.slane %v462, %v466
    %v472 = vunpack.c.l.b16 %v458
    %v473 = vunpack.c.l.b16 %v459
    %v474 = vunpack.c.l.b16 %v460
    %v475 = vunpack.c.l.b16 %v461
    %v476 = vpack.c.b16 %v473, %v472
    %v477 = vpack.c.b16 %v475, %v474
    %478 = vrot.lane.b32.xlu0 %v476, 120
    %v479 = vpop.permute.xlu0 %478
    %480 = vrot.lane.b32.xlu0 %v477, 120
    %v481 = vpop.permute.xlu0 %480
    %484 = vrot.lane.b32.xlu0 %v467, 120
    %v485 = vpop.permute.xlu0 %484
    %487 = vmatprep.subr.bf16.mxu0 0
    %488 = vmatpush1.bf16.msra.mxu0 0
    %489 = vmatprep.subr.bf16.mxu0 0
    %490 = vmatpush1.bf16.msra.mxu0 0
    %491 = vmatprep.subr.bf16.mxu0 0
    %492 = vmatpush1.bf16.msra.mxu0 0
    %493 = vmatprep.subr.bf16.mxu0 0
    %494 = vmatpush1.bf16.msra.mxu0 0
    %495 = vmatprep.subr.bf16.mxu0 0
    %496 = vmatpush1.bf16.msra.mxu0 0
    %497 = vmatprep.subr.bf16.mxu0 0
    %498 = vmatpush1.bf16.msra.mxu0 0
    %499 = vmatprep.subr.bf16.mxu0 0
    %500 = vmatpush1.bf16.msra.mxu0 %v481
    %501 = vmatprep.subr.bf16.mxu0 0
    %502 = vmatpush1.bf16.msra.mxu0 %v479
    %503 = vmatprep.subr.bf16.mxu0 0
    %504 = vmatpush2.bf16.msra.mxu0 0
    %505 = vmatprep.subr.bf16.mxu0 0
    %506 = vmatpush2.bf16.msra.mxu0 0
    %507 = vmatprep.subr.bf16.mxu0 0
    %508 = vmatpush2.bf16.msra.mxu0 0
    %509 = vmatprep.subr.bf16.mxu0 0
    %510 = vmatpush2.bf16.msra.mxu0 0
    %511 = vmatprep.subr.bf16.mxu0 0
    %512 = vmatpush2.bf16.msra.mxu0 0
    %513 = vmatprep.subr.bf16.mxu0 0
    %514 = vmatpush2.bf16.msra.mxu0 0
    %515 = vmatprep.subr.bf16.mxu0 0
    %516 = vmatpush2.bf16.msra.mxu0 0
    %517 = vmatprep.subr.bf16.mxu0 0
    %518 = vmatpush2.bf16.msra.mxu0 0
    %519 = vmatprep.mubr.bf16.mxu0 0
    %520 = vmatmul.mubr.bf16.gmra.mxu0 %v209
    %v521 = vpop.f32.mrf.mxu0
    %v522 = vadd.f32 %v485, %v521
    %v523 = vpop.f32.mrf.mxu0
    %v524 = vpop.f32.mrf.mxu0
    %v525 = vadd.f32 %v485, %v524
    %v526 = vpop.f32.mrf.mxu0
    %527 = vdwg.mxu0
    %v528 = vld [vmem:[#allocation10] sm:$0xf]
    %v529 = vld [vmem:[#allocation10 + $0x4] sm:$0xf]
    %v530 = vld [vmem:[#allocation10 + $0x8] sm:$0xf]
    %v531 = vld [vmem:[#allocation10 + $0xc] sm:$0xf]
    %v532 = vld [vmem:[#allocation11] sm:$0x1]
    %v534 = vlaneseq
    %v535 = vshrl.u32 %v534, 7
    %v536 = vsub.s32 0, %v535
    %v537 = vrot.slane %v532, %v536
    %v542 = vunpack.c.l.b16 %v528
    %v543 = vunpack.c.l.b16 %v529
    %v544 = vunpack.c.l.b16 %v530
    %v545 = vunpack.c.l.b16 %v531
    %v546 = vpack.c.b16 %v543, %v542
    %v547 = vpack.c.b16 %v545, %v544
    %548 = vrot.lane.b32.xlu0 %v546, 120
    %v549 = vpop.permute.xlu0 %548
    %550 = vrot.lane.b32.xlu0 %v547, 120
    %v551 = vpop.permute.xlu0 %550
    %554 = vrot.lane.b32.xlu0 %v537, 120
    %v555 = vpop.permute.xlu0 %554
    %557 = vmatprep.subr.bf16.mxu0 0
    %558 = vmatpush1.bf16.msra.mxu0 0
    %559 = vmatprep.subr.bf16.mxu0 0
    %560 = vmatpush1.bf16.msra.mxu0 0
    %561 = vmatprep.subr.bf16.mxu0 0
    %562 = vmatpush1.bf16.msra.mxu0 0
    %563 = vmatprep.subr.bf16.mxu0 0
    %564 = vmatpush1.bf16.msra.mxu0 0
    %565 = vmatprep.subr.bf16.mxu0 0
    %566 = vmatpush1.bf16.msra.mxu0 0
    %567 = vmatprep.subr.bf16.mxu0 0
    %568 = vmatpush1.bf16.msra.mxu0 0
    %569 = vmatprep.subr.bf16.mxu0 0
    %570 = vmatpush1.bf16.msra.mxu0 %v551
    %571 = vmatprep.subr.bf16.mxu0 0
    %572 = vmatpush1.bf16.msra.mxu0 %v549
    %573 = vmatprep.subr.bf16.mxu0 0
    %574 = vmatpush2.bf16.msra.mxu0 0
    %575 = vmatprep.subr.bf16.mxu0 0
    %576 = vmatpush2.bf16.msra.mxu0 0
    %577 = vmatprep.subr.bf16.mxu0 0
    %578 = vmatpush2.bf16.msra.mxu0 0
    %579 = vmatprep.subr.bf16.mxu0 0
    %580 = vmatpush2.bf16.msra.mxu0 0
    %581 = vmatprep.subr.bf16.mxu0 0
    %582 = vmatpush2.bf16.msra.mxu0 0
    %583 = vmatprep.subr.bf16.mxu0 0
    %584 = vmatpush2.bf16.msra.mxu0 0
    %585 = vmatprep.subr.bf16.mxu0 0
    %586 = vmatpush2.bf16.msra.mxu0 0
    %587 = vmatprep.subr.bf16.mxu0 0
    %588 = vmatpush2.bf16.msra.mxu0 0
    %589 = vmatprep.mubr.bf16.mxu0 0
    %590 = vmatmul.mubr.bf16.gmra.mxu0 %v209
    %v591 = vpop.f32.mrf.mxu0
    %v592 = vadd.f32 %v555, %v591
    %v593 = vpop.f32.mrf.mxu0
    %v594 = vpop.f32.mrf.mxu0
    %v595 = vadd.f32 %v555, %v594
    %v596 = vpop.f32.mrf.mxu0
    %597 = vdwg.mxu0
    %v598 = vpack.c.bf16 %v522, %v522
    %v599 = vpack.c.bf16 %v525, %v525
    %v600 = vpack.c.bf16 %v592, %v592
    %v601 = vpack.c.bf16 %v595, %v595
    %v603 = vsel %vm182, %v598, 0
    %v606 = vsel %vm182, %v600, 0
    %608 = vmatprep.subr.bf16.mxu0 0
    %609 = vmatpush1.bf16.xpose.msra.mxu0 0
    %610 = vmatprep.subr.bf16.mxu0 0
    %611 = vmatpush1.bf16.xpose.msra.mxu0 0
    %612 = vmatprep.subr.bf16.mxu0 0
    %613 = vmatpush1.bf16.xpose.msra.mxu0 0
    %614 = vmatprep.subr.bf16.mxu0 0
    %615 = vmatpush1.bf16.xpose.msra.mxu0 0
    %616 = vmatprep.subr.bf16.mxu0 0
    %617 = vmatpush1.bf16.xpose.msra.mxu0 0
    %618 = vmatprep.subr.bf16.mxu0 0
    %619 = vmatpush1.bf16.xpose.msra.mxu0 0
    %620 = vmatprep.subr.bf16.mxu0 0
    %621 = vmatpush1.bf16.xpose.msra.mxu0 0
    %622 = vmatprep.subr.bf16.mxu0 0
    %623 = vmatpush1.bf16.xpose.msra.mxu0 %v606
    %624 = vmatprep.subr.bf16.mxu0 0
    %625 = vmatpush2.bf16.xpose.msra.mxu0 0
    %626 = vmatprep.subr.bf16.mxu0 0
    %627 = vmatpush2.bf16.xpose.msra.mxu0 0
    %628 = vmatprep.subr.bf16.mxu0 0
    %629 = vmatpush2.bf16.xpose.msra.mxu0 0
    %630 = vmatprep.subr.bf16.mxu0 0
    %631 = vmatpush2.bf16.xpose.msra.mxu0 0
    %632 = vmatprep.subr.bf16.mxu0 0
    %633 = vmatpush2.bf16.xpose.msra.mxu0 0
    %634 = vmatprep.subr.bf16.mxu0 0
    %635 = vmatpush2.bf16.xpose.msra.mxu0 0
    %636 = vmatprep.subr.bf16.mxu0 0
    %637 = vmatpush2.bf16.xpose.msra.mxu0 0
    %638 = vmatprep.subr.bf16.mxu0 0
    %639 = vmatpush2.bf16.xpose.msra.mxu0 0
    %640 = vmatprep.mubr.bf16.mxu0 0
    %641 = vmatmul.mubr.bf16.gmra.mxu0 %v603
    %v642 = vpop.f32.mrf.mxu0
    %v643 = vadd.f32 0.0, %v642
    %v644 = vpop.f32.mrf.mxu0
    %v645 = vpop.f32.mrf.mxu0
    %v646 = vpop.f32.mrf.mxu0
    %647 = vdwg.mxu0
    %v649 = vsel %vm182, %v599, 0
    %v652 = vsel %vm182, %v601, 0
    %654 = vmatprep.subr.bf16.mxu0 0
    %655 = vmatpush1.bf16.xpose.msra.mxu0 0
    %656 = vmatprep.subr.bf16.mxu0 0
    %657 = vmatpush1.bf16.xpose.msra.mxu0 0
    %658 = vmatprep.subr.bf16.mxu0 0
    %659 = vmatpush1.bf16.xpose.msra.mxu0 0
    %660 = vmatprep.subr.bf16.mxu0 0
    %661 = vmatpush1.bf16.xpose.msra.mxu0 0
    %662 = vmatprep.subr.bf16.mxu0 0
    %663 = vmatpush1.bf16.xpose.msra.mxu0 0
    %664 = vmatprep.subr.bf16.mxu0 0
    %665 = vmatpush1.bf16.xpose.msra.mxu0 0
    %666 = vmatprep.subr.bf16.mxu0 0
    %667 = vmatpush1.bf16.xpose.msra.mxu0 0
    %668 = vmatprep.subr.bf16.mxu0 0
    %669 = vmatpush1.bf16.xpose.msra.mxu0 %v652
    %670 = vmatprep.subr.bf16.mxu0 0
    %671 = vmatpush2.bf16.xpose.msra.mxu0 0
    %672 = vmatprep.subr.bf16.mxu0 0
    %673 = vmatpush2.bf16.xpose.msra.mxu0 0
    %674 = vmatprep.subr.bf16.mxu0 0
    %675 = vmatpush2.bf16.xpose.msra.mxu0 0
    %676 = vmatprep.subr.bf16.mxu0 0
    %677 = vmatpush2.bf16.xpose.msra.mxu0 0
    %678 = vmatprep.subr.bf16.mxu0 0
    %679 = vmatpush2.bf16.xpose.msra.mxu0 0
    %680 = vmatprep.subr.bf16.mxu0 0
    %681 = vmatpush2.bf16.xpose.msra.mxu0 0
    %682 = vmatprep.subr.bf16.mxu0 0
    %683 = vmatpush2.bf16.xpose.msra.mxu0 0
    %684 = vmatprep.subr.bf16.mxu0 0
    %685 = vmatpush2.bf16.xpose.msra.mxu0 0
    %686 = vmatprep.mubr.bf16.mxu0 0
    %687 = vmatmul.mubr.bf16.gmra.mxu0 %v649
    %v688 = vpop.f32.mrf.mxu0
    %v689 = vadd.f32 0.0, %v688
    %v690 = vpop.f32.mrf.mxu0
    %v691 = vpop.f32.mrf.mxu0
    %v692 = vpop.f32.mrf.mxu0
    %693 = vdwg.mxu0
    %v694 = vmul.f32 %v643, 0.35355338
    %v695 = vmul.f32 %v689, 0.35355338
    %v696 = vsel %vm426, -1e+09, %v694
    %v697 = vsel %vm427, -1e+09, %v695
    %v698 = vld [vmem:[#allocation14] sm:$0xff]
    %v699 = vld [vmem:[#allocation14 + $0x8] sm:$0xff]
    %v700 = vsel %vm182, %v696, -inf
    %701 = vmax.xlane.f32.xlu0 %v700
    %v702 = vpop.xlane.xlu0 %701
    %v703 = vsel %vm182, %v697, -inf
    %704 = vmax.xlane.f32.xlu0 %v703
    %v705 = vpop.xlane.xlu0 %704
    %v706 = vsub.f32 %v696, %v702
    %v707 = vsub.f32 %v697, %v705
    %v708 = vmul.f32 %v706, 1.442695
    %v709 = vpow.pop %v708
    %v710 = vmul.f32 %v707, 1.442695
    %v711 = vpow.pop %v710
    %v712 = vsel %vm182, %v709, 0.0
    %713 = vadd.xlane.f32.xlu0 %v712
    %v714 = vpop.xlane.xlu0 %713
    %v715 = vsel %vm182, %v711, 0.0
    %716 = vadd.xlane.f32.xlu0 %v715
    %v717 = vpop.xlane.xlu0 %716
    %v718 = vrcp.pop %v714
    %v719 = vmul.f32 %v709, %v718
    %v720 = vrcp.pop %v717
    %v721 = vmul.f32 %v711, %v720
    %v722 = vadd.f32 %v698, %v719
    %v723 = vadd.f32 %v699, %v721
    %724 = vst.msk [vmem:[#allocation14] sm:$0xff] %vm182, %v722
    %725 = vst.msk [vmem:[#allocation14 + $0x8] sm:$0xff] %vm182, %v723
    %v726 = vld [vmem:[#allocation7] sm:$0xf]
    %v727 = vld [vmem:[#allocation7 + $0x4] sm:$0xf]
    %v728 = vld [vmem:[#allocation7 + $0x8] sm:$0xf]
    %v729 = vld [vmem:[#allocation7 + $0xc] sm:$0xf]
    %v730 = vld [vmem:[#allocation8] sm:$0x1]
    %v732 = vlaneseq
    %v733 = vshrl.u32 %v732, 7
    %v734 = vsub.s32 0, %v733
    %v735 = vrot.slane %v730, %v734
    %v740 = vunpack.c.l.b16 %v726
    %v741 = vunpack.c.l.b16 %v727
    %v742 = vunpack.c.l.b16 %v728
    %v743 = vunpack.c.l.b16 %v729
    %v744 = vpack.c.b16 %v741, %v740
    %v745 = vpack.c.b16 %v743, %v742
    %746 = vrot.lane.b32.xlu0 %v744, 112
    %v747 = vpop.permute.xlu0 %746
    %748 = vrot.lane.b32.xlu0 %v745, 112
    %v749 = vpop.permute.xlu0 %748
    %752 = vrot.lane.b32.xlu0 %v735, 112
    %v753 = vpop.permute.xlu0 %752
    %755 = vmatprep.subr.bf16.mxu0 0
    %756 = vmatpush1.bf16.msra.mxu0 0
    %757 = vmatprep.subr.bf16.mxu0 0
    %758 = vmatpush1.bf16.msra.mxu0 0
    %759 = vmatprep.subr.bf16.mxu0 0
    %760 = vmatpush1.bf16.msra.mxu0 0
    %761 = vmatprep.subr.bf16.mxu0 0
    %762 = vmatpush1.bf16.msra.mxu0 0
    %763 = vmatprep.subr.bf16.mxu0 0
    %764 = vmatpush1.bf16.msra.mxu0 0
    %765 = vmatprep.subr.bf16.mxu0 0
    %766 = vmatpush1.bf16.msra.mxu0 0
    %767 = vmatprep.subr.bf16.mxu0 0
    %768 = vmatpush1.bf16.msra.mxu0 %v749
    %769 = vmatprep.subr.bf16.mxu0 0
    %770 = vmatpush1.bf16.msra.mxu0 %v747
    %771 = vmatprep.subr.bf16.mxu0 0
    %772 = vmatpush2.bf16.msra.mxu0 0
    %773 = vmatprep.subr.bf16.mxu0 0
    %774 = vmatpush2.bf16.msra.mxu0 0
    %775 = vmatprep.subr.bf16.mxu0 0
    %776 = vmatpush2.bf16.msra.mxu0 0
    %777 = vmatprep.subr.bf16.mxu0 0
    %778 = vmatpush2.bf16.msra.mxu0 0
    %779 = vmatprep.subr.bf16.mxu0 0
    %780 = vmatpush2.bf16.msra.mxu0 0
    %781 = vmatprep.subr.bf16.mxu0 0
    %782 = vmatpush2.bf16.msra.mxu0 0
    %783 = vmatprep.subr.bf16.mxu0 0
    %784 = vmatpush2.bf16.msra.mxu0 0
    %785 = vmatprep.subr.bf16.mxu0 0
    %786 = vmatpush2.bf16.msra.mxu0 0
    %787 = vmatprep.mubr.bf16.mxu0 0
    %788 = vmatmul.mubr.bf16.gmra.mxu0 %v209
    %v789 = vpop.f32.mrf.mxu0
    %v790 = vadd.f32 %v753, %v789
    %v791 = vpop.f32.mrf.mxu0
    %v792 = vpop.f32.mrf.mxu0
    %v793 = vadd.f32 %v753, %v792
    %v794 = vpop.f32.mrf.mxu0
    %795 = vdwg.mxu0
    %v796 = vld [vmem:[#allocation10] sm:$0xf]
    %v797 = vld [vmem:[#allocation10 + $0x4] sm:$0xf]
    %v798 = vld [vmem:[#allocation10 + $0x8] sm:$0xf]
    %v799 = vld [vmem:[#allocation10 + $0xc] sm:$0xf]
    %v800 = vld [vmem:[#allocation11] sm:$0x1]
    %v802 = vlaneseq
    %v803 = vshrl.u32 %v802, 7
    %v804 = vsub.s32 0, %v803
    %v805 = vrot.slane %v800, %v804
    %v810 = vunpack.c.l.b16 %v796
    %v811 = vunpack.c.l.b16 %v797
    %v812 = vunpack.c.l.b16 %v798
    %v813 = vunpack.c.l.b16 %v799
    %v814 = vpack.c.b16 %v811, %v810
    %v815 = vpack.c.b16 %v813, %v812
    %816 = vrot.lane.b32.xlu0 %v814, 112
    %v817 = vpop.permute.xlu0 %816
    %818 = vrot.lane.b32.xlu0 %v815, 112
    %v819 = vpop.permute.xlu0 %818
    %822 = vrot.lane.b32.xlu0 %v805, 112
    %v823 = vpop.permute.xlu0 %822
    %825 = vmatprep.subr.bf16.mxu0 0
    %826 = vmatpush1.bf16.msra.mxu0 0
    %827 = vmatprep.subr.bf16.mxu0 0
    %828 = vmatpush1.bf16.msra.mxu0 0
    %829 = vmatprep.subr.bf16.mxu0 0
    %830 = vmatpush1.bf16.msra.mxu0 0
    %831 = vmatprep.subr.bf16.mxu0 0
    %832 = vmatpush1.bf16.msra.mxu0 0
    %833 = vmatprep.subr.bf16.mxu0 0
    %834 = vmatpush1.bf16.msra.mxu0 0
    %835 = vmatprep.subr.bf16.mxu0 0
    %836 = vmatpush1.bf16.msra.mxu0 0
    %837 = vmatprep.subr.bf16.mxu0 0
    %838 = vmatpush1.bf16.msra.mxu0 %v819
    %839 = vmatprep.subr.bf16.mxu0 0
    %840 = vmatpush1.bf16.msra.mxu0 %v817
    %841 = vmatprep.subr.bf16.mxu0 0
    %842 = vmatpush2.bf16.msra.mxu0 0
    %843 = vmatprep.subr.bf16.mxu0 0
    %844 = vmatpush2.bf16.msra.mxu0 0
    %845 = vmatprep.subr.bf16.mxu0 0
    %846 = vmatpush2.bf16.msra.mxu0 0
    %847 = vmatprep.subr.bf16.mxu0 0
    %848 = vmatpush2.bf16.msra.mxu0 0
    %849 = vmatprep.subr.bf16.mxu0 0
    %850 = vmatpush2.bf16.msra.mxu0 0
    %851 = vmatprep.subr.bf16.mxu0 0
    %852 = vmatpush2.bf16.msra.mxu0 0
    %853 = vmatprep.subr.bf16.mxu0 0
    %854 = vmatpush2.bf16.msra.mxu0 0
    %855 = vmatprep.subr.bf16.mxu0 0
    %856 = vmatpush2.bf16.msra.mxu0 0
    %857 = vmatprep.mubr.bf16.mxu0 0
    %858 = vmatmul.mubr.bf16.gmra.mxu0 %v209
    %v859 = vpop.f32.mrf.mxu0
    %v860 = vadd.f32 %v823, %v859
    %v861 = vpop.f32.mrf.mxu0
    %v862 = vpop.f32.mrf.mxu0
    %v863 = vadd.f32 %v823, %v862
    %v864 = vpop.f32.mrf.mxu0
    %865 = vdwg.mxu0
    %v866 = vpack.c.bf16 %v790, %v790
    %v867 = vpack.c.bf16 %v793, %v793
    %v868 = vpack.c.bf16 %v860, %v860
    %v869 = vpack.c.bf16 %v863, %v863
    %v871 = vsel %vm182, %v866, 0
    %v874 = vsel %vm182, %v868, 0
    %876 = vmatprep.subr.bf16.mxu0 0
    %877 = vmatpush1.bf16.xpose.msra.mxu0 0
    %878 = vmatprep.subr.bf16.mxu0 0
    %879 = vmatpush1.bf16.xpose.msra.mxu0 0
    %880 = vmatprep.subr.bf16.mxu0 0
    %881 = vmatpush1.bf16.xpose.msra.mxu0 0
    %882 = vmatprep.subr.bf16.mxu0 0
    %883 = vmatpush1.bf16.xpose.msra.mxu0 0
    %884 = vmatprep.subr.bf16.mxu0 0
    %885 = vmatpush1.bf16.xpose.msra.mxu0 0
    %886 = vmatprep.subr.bf16.mxu0 0
    %887 = vmatpush1.bf16.xpose.msra.mxu0 0
    %888 = vmatprep.subr.bf16.mxu0 0
    %889 = vmatpush1.bf16.xpose.msra.mxu0 0
    %890 = vmatprep.subr.bf16.mxu0 0
    %891 = vmatpush1.bf16.xpose.msra.mxu0 %v874
    %892 = vmatprep.subr.bf16.mxu0 0
    %893 = vmatpush2.bf16.xpose.msra.mxu0 0
    %894 = vmatprep.subr.bf16.mxu0 0
    %895 = vmatpush2.bf16.xpose.msra.mxu0 0
    %896 = vmatprep.subr.bf16.mxu0 0
    %897 = vmatpush2.bf16.xpose.msra.mxu0 0
    %898 = vmatprep.subr.bf16.mxu0 0
    %899 = vmatpush2.bf16.xpose.msra.mxu0 0
    %900 = vmatprep.subr.bf16.mxu0 0
    %901 = vmatpush2.bf16.xpose.msra.mxu0 0
    %902 = vmatprep.subr.bf16.mxu0 0
    %903 = vmatpush2.bf16.xpose.msra.mxu0 0
    %904 = vmatprep.subr.bf16.mxu0 0
    %905 = vmatpush2.bf16.xpose.msra.mxu0 0
    %906 = vmatprep.subr.bf16.mxu0 0
    %907 = vmatpush2.bf16.xpose.msra.mxu0 0
    %908 = vmatprep.mubr.bf16.mxu0 0
    %909 = vmatmul.mubr.bf16.gmra.mxu0 %v871
    %v910 = vpop.f32.mrf.mxu0
    %v911 = vadd.f32 0.0, %v910
    %v912 = vpop.f32.mrf.mxu0
    %v913 = vpop.f32.mrf.mxu0
    %v914 = vpop.f32.mrf.mxu0
    %915 = vdwg.mxu0
    %v917 = vsel %vm182, %v867, 0
    %v920 = vsel %vm182, %v869, 0
    %922 = vmatprep.subr.bf16.mxu0 0
    %923 = vmatpush1.bf16.xpose.msra.mxu0 0
    %924 = vmatprep.subr.bf16.mxu0 0
    %925 = vmatpush1.bf16.xpose.msra.mxu0 0
    %926 = vmatprep.subr.bf16.mxu0 0
    %927 = vmatpush1.bf16.xpose.msra.mxu0 0
    %928 = vmatprep.subr.bf16.mxu0 0
    %929 = vmatpush1.bf16.xpose.msra.mxu0 0
    %930 = vmatprep.subr.bf16.mxu0 0
    %931 = vmatpush1.bf16.xpose.msra.mxu0 0
    %932 = vmatprep.subr.bf16.mxu0 0
    %933 = vmatpush1.bf16.xpose.msra.mxu0 0
    %934 = vmatprep.subr.bf16.mxu0 0
    %935 = vmatpush1.bf16.xpose.msra.mxu0 0
    %936 = vmatprep.subr.bf16.mxu0 0
    %937 = vmatpush1.bf16.xpose.msra.mxu0 %v920
    %938 = vmatprep.subr.bf16.mxu0 0
    %939 = vmatpush2.bf16.xpose.msra.mxu0 0
    %940 = vmatprep.subr.bf16.mxu0 0
    %941 = vmatpush2.bf16.xpose.msra.mxu0 0
    %942 = vmatprep.subr.bf16.mxu0 0
    %943 = vmatpush2.bf16.xpose.msra.mxu0 0
    %944 = vmatprep.subr.bf16.mxu0 0
    %945 = vmatpush2.bf16.xpose.msra.mxu0 0
    %946 = vmatprep.subr.bf16.mxu0 0
    %947 = vmatpush2.bf16.xpose.msra.mxu0 0
    %948 = vmatprep.subr.bf16.mxu0 0
    %949 = vmatpush2.bf16.xpose.msra.mxu0 0
    %950 = vmatprep.subr.bf16.mxu0 0
    %951 = vmatpush2.bf16.xpose.msra.mxu0 0
    %952 = vmatprep.subr.bf16.mxu0 0
    %953 = vmatpush2.bf16.xpose.msra.mxu0 0
    %954 = vmatprep.mubr.bf16.mxu0 0
    %955 = vmatmul.mubr.bf16.gmra.mxu0 %v917
    %v956 = vpop.f32.mrf.mxu0
    %v957 = vadd.f32 0.0, %v956
    %v958 = vpop.f32.mrf.mxu0
    %v959 = vpop.f32.mrf.mxu0
    %v960 = vpop.f32.mrf.mxu0
    %961 = vdwg.mxu0
    %v962 = vmul.f32 %v911, 0.35355338
    %v963 = vmul.f32 %v957, 0.35355338
    %v964 = vsel %vm426, -1e+09, %v962
    %v965 = vsel %vm427, -1e+09, %v963
    %v966 = vld [vmem:[#allocation14] sm:$0xff]
    %v967 = vld [vmem:[#allocation14 + $0x8] sm:$0xff]
    %v968 = vsel %vm182, %v964, -inf
    %969 = vmax.xlane.f32.xlu0 %v968
    %v970 = vpop.xlane.xlu0 %969
    %v971 = vsel %vm182, %v965, -inf
    %972 = vmax.xlane.f32.xlu0 %v971
    %v973 = vpop.xlane.xlu0 %972
    %v974 = vsub.f32 %v964, %v970
    %v975 = vsub.f32 %v965, %v973
    %v976 = vmul.f32 %v974, 1.442695
    %v977 = vpow.pop %v976
    %v978 = vmul.f32 %v975, 1.442695
    %v979 = vpow.pop %v978
    %v980 = vsel %vm182, %v977, 0.0
    %981 = vadd.xlane.f32.xlu0 %v980
    %v982 = vpop.xlane.xlu0 %981
    %v983 = vsel %vm182, %v979, 0.0
    %984 = vadd.xlane.f32.xlu0 %v983
    %v985 = vpop.xlane.xlu0 %984
    %v986 = vrcp.pop %v982
    %v987 = vmul.f32 %v977, %v986
    %v988 = vrcp.pop %v985
    %v989 = vmul.f32 %v979, %v988
    %v990 = vadd.f32 %v966, %v987
    %v991 = vadd.f32 %v967, %v989
    %992 = vst.msk [vmem:[#allocation14] sm:$0xff] %vm182, %v990
    %993 = vst.msk [vmem:[#allocation14 + $0x8] sm:$0xff] %vm182, %v991
    %v994 = vld [vmem:[#allocation7] sm:$0xf]
    %v995 = vld [vmem:[#allocation7 + $0x4] sm:$0xf]
    %v996 = vld [vmem:[#allocation7 + $0x8] sm:$0xf]
    %v997 = vld [vmem:[#allocation7 + $0xc] sm:$0xf]
    %v998 = vld [vmem:[#allocation8] sm:$0x1]
    %v1000 = vlaneseq
    %v1001 = vshrl.u32 %v1000, 7
    %v1002 = vsub.s32 0, %v1001
    %v1003 = vrot.slane %v998, %v1002
    %v1008 = vunpack.c.l.b16 %v994
    %v1009 = vunpack.c.l.b16 %v995
    %v1010 = vunpack.c.l.b16 %v996
    %v1011 = vunpack.c.l.b16 %v997
    %v1012 = vpack.c.b16 %v1009, %v1008
    %v1013 = vpack.c.b16 %v1011, %v1010
    %1014 = vrot.lane.b32.xlu0 %v1012, 104
    %v1015 = vpop.permute.xlu0 %1014
    %1016 = vrot.lane.b32.xlu0 %v1013, 104
    %v1017 = vpop.permute.xlu0 %1016
    %1020 = vrot.lane.b32.xlu0 %v1003, 104
    %v1021 = vpop.permute.xlu0 %1020
    %1023 = vmatprep.subr.bf16.mxu0 0
    %1024 = vmatpush1.bf16.msra.mxu0 0
    %1025 = vmatprep.subr.bf16.mxu0 0
    %1026 = vmatpush1.bf16.msra.mxu0 0
    %1027 = vmatprep.subr.bf16.mxu0 0
    %1028 = vmatpush1.bf16.msra.mxu0 0
    %1029 = vmatprep.subr.bf16.mxu0 0
    %1030 = vmatpush1.bf16.msra.mxu0 0
    %1031 = vmatprep.subr.bf16.mxu0 0
    %1032 = vmatpush1.bf16.msra.mxu0 0
    %1033 = vmatprep.subr.bf16.mxu0 0
    %1034 = vmatpush1.bf16.msra.mxu0 0
    %1035 = vmatprep.subr.bf16.mxu0 0
    %1036 = vmatpush1.bf16.msra.mxu0 %v1017
    %1037 = vmatprep.subr.bf16.mxu0 0
    %1038 = vmatpush1.bf16.msra.mxu0 %v1015
    %1039 = vmatprep.subr.bf16.mxu0 0
    %1040 = vmatpush2.bf16.msra.mxu0 0
    %1041 = vmatprep.subr.bf16.mxu0 0
    %1042 = vmatpush2.bf16.msra.mxu0 0
    %1043 = vmatprep.subr.bf16.mxu0 0
    %1044 = vmatpush2.bf16.msra.mxu0 0
    %1045 = vmatprep.subr.bf16.mxu0 0
    %1046 = vmatpush2.bf16.msra.mxu0 0
    %1047 = vmatprep.subr.bf16.mxu0 0
    %1048 = vmatpush2.bf16.msra.mxu0 0
    %1049 = vmatprep.subr.bf16.mxu0 0
    %1050 = vmatpush2.bf16.msra.mxu0 0
    %1051 = vmatprep.subr.bf16.mxu0 0
    %1052 = vmatpush2.bf16.msra.mxu0 0
    %1053 = vmatprep.subr.bf16.mxu0 0
    %1054 = vmatpush2.bf16.msra.mxu0 0
    %1055 = vmatprep.mubr.bf16.mxu0 0
    %1056 = vmatmul.mubr.bf16.gmra.mxu0 %v209
    %v1057 = vpop.f32.mrf.mxu0
    %v1058 = vadd.f32 %v1021, %v1057
    %v1059 = vpop.f32.mrf.mxu0
    %v1060 = vpop.f32.mrf.mxu0
    %v1061 = vadd.f32 %v1021, %v1060
    %v1062 = vpop.f32.mrf.mxu0
    %1063 = vdwg.mxu0
    %v1064 = vld [vmem:[#allocation10] sm:$0xf]
    %v1065 = vld [vmem:[#allocation10 + $0x4] sm:$0xf]
    %v1066 = vld [vmem:[#allocation10 + $0x8] sm:$0xf]
    %v1067 = vld [vmem:[#allocation10 + $0xc] sm:$0xf]
    %v1068 = vld [vmem:[#allocation11] sm:$0x1]
    %v1070 = vlaneseq
    %v1071 = vshrl.u32 %v1070, 7
    %v1072 = vsub.s32 0, %v1071
    %v1073 = vrot.slane %v1068, %v1072
    %v1078 = vunpack.c.l.b16 %v1064
    %v1079 = vunpack.c.l.b16 %v1065
    %v1080 = vunpack.c.l.b16 %v1066
    %v1081 = vunpack.c.l.b16 %v1067
    %v1082 = vpack.c.b16 %v1079, %v1078
    %v1083 = vpack.c.b16 %v1081, %v1080
    %1084 = vrot.lane.b32.xlu0 %v1082, 104
    %v1085 = vpop.permute.xlu0 %1084
    %1086 = vrot.lane.b32.xlu0 %v1083, 104
    %v1087 = vpop.permute.xlu0 %1086
    %1090 = vrot.lane.b32.xlu0 %v1073, 104
    %v1091 = vpop.permute.xlu0 %1090
    %1093 = vmatprep.subr.bf16.mxu0 0
    %1094 = vmatpush1.bf16.msra.mxu0 0
    %1095 = vmatprep.subr.bf16.mxu0 0
    %1096 = vmatpush1.bf16.msra.mxu0 0
    %1097 = vmatprep.subr.bf16.mxu0 0
    %1098 = vmatpush1.bf16.msra.mxu0 0
    %1099 = vmatprep.subr.bf16.mxu0 0
    %1100 = vmatpush1.bf16.msra.mxu0 0
    %1101 = vmatprep.subr.bf16.mxu0 0
    %1102 = vmatpush1.bf16.msra.mxu0 0
    %1103 = vmatprep.subr.bf16.mxu0 0
    %1104 = vmatpush1.bf16.msra.mxu0 0
    %1105 = vmatprep.subr.bf16.mxu0 0
    %1106 = vmatpush1.bf16.msra.mxu0 %v1087
    %1107 = vmatprep.subr.bf16.mxu0 0
    %1108 = vmatpush1.bf16.msra.mxu0 %v1085
    %1109 = vmatprep.subr.bf16.mxu0 0
    %1110 = vmatpush2.bf16.msra.mxu0 0
    %1111 = vmatprep.subr.bf16.mxu0 0
    %1112 = vmatpush2.bf16.msra.mxu0 0
    %1113 = vmatprep.subr.bf16.mxu0 0
    %1114 = vmatpush2.bf16.msra.mxu0 0
    %1115 = vmatprep.subr.bf16.mxu0 0
    %1116 = vmatpush2.bf16.msra.mxu0 0
    %1117 = vmatprep.subr.bf16.mxu0 0
    %1118 = vmatpush2.bf16.msra.mxu0 0
    %1119 = vmatprep.subr.bf16.mxu0 0
    %1120 = vmatpush2.bf16.msra.mxu0 0
    %1121 = vmatprep.subr.bf16.mxu0 0
    %1122 = vmatpush2.bf16.msra.mxu0 0
    %1123 = vmatprep.subr.bf16.mxu0 0
    %1124 = vmatpush2.bf16.msra.mxu0 0
    %1125 = vmatprep.mubr.bf16.mxu0 0
    %1126 = vmatmul.mubr.bf16.gmra.mxu0 %v209
    %v1127 = vpop.f32.mrf.mxu0
    %v1128 = vadd.f32 %v1091, %v1127
    %v1129 = vpop.f32.mrf.mxu0
    %v1130 = vpop.f32.mrf.mxu0
    %v1131 = vadd.f32 %v1091, %v1130
    %v1132 = vpop.f32.mrf.mxu0
    %1133 = vdwg.mxu0
    %v1134 = vpack.c.bf16 %v1058, %v1058
    %v1135 = vpack.c.bf16 %v1061, %v1061
    %v1136 = vpack.c.bf16 %v1128, %v1128
    %v1137 = vpack.c.bf16 %v1131, %v1131
    %v1139 = vsel %vm182, %v1134, 0
    %v1142 = vsel %vm182, %v1136, 0
    %1144 = vmatprep.subr.bf16.mxu0 0
    %1145 = vmatpush1.bf16.xpose.msra.mxu0 0
    %1146 = vmatprep.subr.bf16.mxu0 0
    %1147 = vmatpush1.bf16.xpose.msra.mxu0 0
    %1148 = vmatprep.subr.bf16.mxu0 0
    %1149 = vmatpush1.bf16.xpose.msra.mxu0 0
    %1150 = vmatprep.subr.bf16.mxu0 0
    %1151 = vmatpush1.bf16.xpose.msra.mxu0 0
    %1152 = vmatprep.subr.bf16.mxu0 0
    %1153 = vmatpush1.bf16.xpose.msra.mxu0 0
    %1154 = vmatprep.subr.bf16.mxu0 0
    %1155 = vmatpush1.bf16.xpose.msra.mxu0 0
    %1156 = vmatprep.subr.bf16.mxu0 0
    %1157 = vmatpush1.bf16.xpose.msra.mxu0 0
    %1158 = vmatprep.subr.bf16.mxu0 0
    %1159 = vmatpush1.bf16.xpose.msra.mxu0 %v1142
    %1160 = vmatprep.subr.bf16.mxu0 0
    %1161 = vmatpush2.bf16.xpose.msra.mxu0 0
    %1162 = vmatprep.subr.bf16.mxu0 0
    %1163 = vmatpush2.bf16.xpose.msra.mxu0 0
    %1164 = vmatprep.subr.bf16.mxu0 0
    %1165 = vmatpush2.bf16.xpose.msra.mxu0 0
    %1166 = vmatprep.subr.bf16.mxu0 0
    %1167 = vmatpush2.bf16.xpose.msra.mxu0 0
    %1168 = vmatprep.subr.bf16.mxu0 0
    %1169 = vmatpush2.bf16.xpose.msra.mxu0 0
    %1170 = vmatprep.subr.bf16.mxu0 0
    %1171 = vmatpush2.bf16.xpose.msra.mxu0 0
    %1172 = vmatprep.subr.bf16.mxu0 0
    %1173 = vmatpush2.bf16.xpose.msra.mxu0 0
    %1174 = vmatprep.subr.bf16.mxu0 0
    %1175 = vmatpush2.bf16.xpose.msra.mxu0 0
    %1176 = vmatprep.mubr.bf16.mxu0 0
    %1177 = vmatmul.mubr.bf16.gmra.mxu0 %v1139
    %v1178 = vpop.f32.mrf.mxu0
    %v1179 = vadd.f32 0.0, %v1178
    %v1180 = vpop.f32.mrf.mxu0
    %v1181 = vpop.f32.mrf.mxu0
    %v1182 = vpop.f32.mrf.mxu0
    %1183 = vdwg.mxu0
    %v1185 = vsel %vm182, %v1135, 0
    %v1188 = vsel %vm182, %v1137, 0
    %1190 = vmatprep.subr.bf16.mxu0 0
    %1191 = vmatpush1.bf16.xpose.msra.mxu0 0
    %1192 = vmatprep.subr.bf16.mxu0 0
    %1193 = vmatpush1.bf16.xpose.msra.mxu0 0
    %1194 = vmatprep.subr.bf16.mxu0 0
    %1195 = vmatpush1.bf16.xpose.msra.mxu0 0
    %1196 = vmatprep.subr.bf16.mxu0 0
    %1197 = vmatpush1.bf16.xpose.msra.mxu0 0
    %1198 = vmatprep.subr.bf16.mxu0 0
    %1199 = vmatpush1.bf16.xpose.msra.mxu0 0
    %1200 = vmatprep.subr.bf16.mxu0 0
    %1201 = vmatpush1.bf16.xpose.msra.mxu0 0
    %1202 = vmatprep.subr.bf16.mxu0 0
    %1203 = vmatpush1.bf16.xpose.msra.mxu0 0
    %1204 = vmatprep.subr.bf16.mxu0 0
    %1205 = vmatpush1.bf16.xpose.msra.mxu0 %v1188
    %1206 = vmatprep.subr.bf16.mxu0 0
    %1207 = vmatpush2.bf16.xpose.msra.mxu0 0
    %1208 = vmatprep.subr.bf16.mxu0 0
    %1209 = vmatpush2.bf16.xpose.msra.mxu0 0
    %1210 = vmatprep.subr.bf16.mxu0 0
    %1211 = vmatpush2.bf16.xpose.msra.mxu0 0
    %1212 = vmatprep.subr.bf16.mxu0 0
    %1213 = vmatpush2.bf16.xpose.msra.mxu0 0
    %1214 = vmatprep.subr.bf16.mxu0 0
    %1215 = vmatpush2.bf16.xpose.msra.mxu0 0
    %1216 = vmatprep.subr.bf16.mxu0 0
    %1217 = vmatpush2.bf16.xpose.msra.mxu0 0
    %1218 = vmatprep.subr.bf16.mxu0 0
    %1219 = vmatpush2.bf16.xpose.msra.mxu0 0
    %1220 = vmatprep.subr.bf16.mxu0 0
    %1221 = vmatpush2.bf16.xpose.msra.mxu0 0
    %1222 = vmatprep.mubr.bf16.mxu0 0
    %1223 = vmatmul.mubr.bf16.gmra.mxu0 %v1185
    %v1224 = vpop.f32.mrf.mxu0
    %v1225 = vadd.f32 0.0, %v1224
    %v1226 = vpop.f32.mrf.mxu0
    %v1227 = vpop.f32.mrf.mxu0
    %v1228 = vpop.f32.mrf.mxu0
    %1229 = vdwg.mxu0
    %v1230 = vmul.f32 %v1179, 0.35355338
    %v1231 = vmul.f32 %v1225, 0.35355338
    %v1232 = vsel %vm426, -1e+09, %v1230
    %v1233 = vsel %vm427, -1e+09, %v1231
    %v1234 = vld [vmem:[#allocation14] sm:$0xff]
    %v1235 = vld [vmem:[#allocation14 + $0x8] sm:$0xff]
    %v1236 = vsel %vm182, %v1232, -inf
    %1237 = vmax.xlane.f32.xlu0 %v1236
    %v1238 = vpop.xlane.xlu0 %1237
    %v1239 = vsel %vm182, %v1233, -inf
    %1240 = vmax.xlane.f32.xlu0 %v1239
    %v1241 = vpop.xlane.xlu0 %1240
    %v1242 = vsub.f32 %v1232, %v1238
    %v1243 = vsub.f32 %v1233, %v1241
    %v1244 = vmul.f32 %v1242, 1.442695
    %v1245 = vpow.pop %v1244
    %v1246 = vmul.f32 %v1243, 1.442695
    %v1247 = vpow.pop %v1246
    %v1248 = vsel %vm182, %v1245, 0.0
    %1249 = vadd.xlane.f32.xlu0 %v1248
    %v1250 = vpop.xlane.xlu0 %1249
    %v1251 = vsel %vm182, %v1247, 0.0
    %1252 = vadd.xlane.f32.xlu0 %v1251
    %v1253 = vpop.xlane.xlu0 %1252
    %v1254 = vrcp.pop %v1250
    %v1255 = vmul.f32 %v1245, %v1254
    %v1256 = vrcp.pop %v1253
    %v1257 = vmul.f32 %v1247, %v1256
    %v1258 = vadd.f32 %v1234, %v1255
    %v1259 = vadd.f32 %v1235, %v1257
    %1260 = vst.msk [vmem:[#allocation14] sm:$0xff] %vm182, %v1258
    %1261 = vst.msk [vmem:[#allocation14 + $0x8] sm:$0xff] %vm182, %v1259
    %v1262 = vld [vmem:[#allocation14] sm:$0xff]
    %v1263 = vld [vmem:[#allocation14 + $0x8] sm:$0xff]
    %v1264 = vmul.f32 %v1262, 0.25
    %v1265 = vmul.f32 %v1263, 0.25
    %v1266 = vld [vmem:[%s9] sm:$0xff]
    %v1267 = vmul.f32 %v1264, %v1266
    %v1268 = vmul.f32 %v1265, %v1266
    %v1269 = vsub.f32 %v1264, %v1267
    %v1270 = vsub.f32 %v1265, %v1268
    %v1271 = vadd.f32 %v1269, %v1266
    %v1272 = vadd.f32 %v1270, %v1266
    %v1273 = vld [vmem:[%s8] sm:$0xff]
    %v1274 = vld [vmem:[%s8 + $0x8] sm:$0xff]
    %1276 = vset.pattern.permute.xlu0 0
    %1277 = vperm.xlu0 %1276, %v1273
    %v1278 = vpop.permute.xlu0 %1277
    %1281 = vset.pattern.permute.xlu0 0
    %1282 = vperm.xlu0 %1281, %v1274
    %v1283 = vpop.permute.xlu0 %1282
    %v1285 = vmul.f32 %v1278, %v1271
    %v1286 = vmul.f32 %v1283, %v1272
    %1287 = vst.msk [vmem:[#allocation14] sm:$0xff] %vm182, %v1285
    %1288 = vst.msk [vmem:[#allocation14 + $0x8] sm:$0xff] %vm182, %v1286
    // Predicated region
    $region66: #{tpu_custom_call.1} parent=1 // pred_check
      _
    $region67: #{tpu_custom_call.1} parent=1 // pred_check_branch
      %1290 = sbr.rel (0) target = $region69
    $region68: #{tpu_custom_call.1} parent=1 // pred_region
      %s1292 = ssub.s32 256, 256
      %1293 = vsyncadd [#allocation4], %s1292
      %s1294 = sshll.u32 [#allocation13], 4
      %s1295 = int_to_ptr.vmem [resolvable:$true] %s1294
      %1300 = dma.vmem_to_hbm [thread:$0]  %s1295, 256, %s10, [#allocation4], 128, 128, 8
    $region69: #{tpu_custom_call.1} parent=1 // pred_fallthru
      _
    // Predicated region
    $region70: #{tpu_custom_call.1} parent=1 // pred_check
      _
    $region71: #{tpu_custom_call.1} parent=1 // pred_check_branch
      %1302 = sbr.rel (0) target = $region73
    $region72: #{tpu_custom_call.1} parent=1 // pred_region
      %s1304 = ssub.s32 256, 256
      %1305 = vsyncadd [#allocation15], %s1304
      %s1306 = sshll.u32 [#allocation14], 4
      %s1307 = int_to_ptr.vmem [resolvable:$true] %s1306
      %1312 = dma.vmem_to_hbm [thread:$0]  %s1307, 256, %s11, [#allocation15], 128, 128, 8
    $region73: #{tpu_custom_call.1} parent=1 // pred_fallthru
      _
    // Predicated region
    $region74: #{tpu_custom_call.1} parent=1 // pred_check
      _
    $region75: #{tpu_custom_call.1} parent=1 // pred_check_branch
      %1314 = sbr.rel (0) target = $region77
    $region76: #{tpu_custom_call.1} parent=1 // pred_region
      %1315 = dma.done [#allocation4], 256
    $region77: #{tpu_custom_call.1} parent=1 // pred_fallthru
      _
    // Predicated region
    $region78: #{tpu_custom_call.1} parent=1 // pred_check
      _
    $region79: #{tpu_custom_call.1} parent=1 // pred_check_branch
      %1317 = sbr.rel (0) target = $region81
    $region80: #{tpu_custom_call.1} parent=1 // pred_region
      %1318 = dma.done [#allocation15], 256
    $region81: #{tpu_custom_call.1} parent=1 // pred_fallthru
      _
    %1319 = vsyncpa [#allocation3], 1
    %1320 = vsyncpa [#allocation6], 1
    %1321 = vsyncpa [#allocation9], 1
    %1322 = vsyncpa [#allocation12], 1
    %1323 = vsyncpa [#allocation4], 1
    %1324 = vsyncpa [#allocation15], 1

</llo_original>
